<compile_context>
chip_gen: v7x
topology: tpu7x:2x2x1
jax: 0.10.0
libtpu: 0.0.40
codegen_flags: <defaults>
</compile_context>

<pallas_src>
import functools

import jax
import jax.numpy as jnp
from jax import lax
from jax.experimental import pallas as pl
from jax.experimental.pallas import tpu as pltpu


def _round_up(x, m):
    return (x + m - 1) // m * m


def _classifier_kernel(v_ref, wg_ref, bg_ref, ww_ref, bw_ref, yhat_ref,
                       yprob_ref, scores_ref,
                       m_sc, l_sc, acc_sc, *, n_valid, need_mask):
    i = pl.program_id(0)
    tile_n = v_ref.shape[0]
    L = ww_ref.shape[1]

    @pl.when(i == 0)
    def _init():
        m_sc[...] = jnp.full_like(m_sc, -jnp.inf)
        l_sc[...] = jnp.zeros_like(l_sc)
        acc_sc[...] = jnp.zeros_like(acc_sc)

    # --- Single fused MXU pass over v: (T, nf) @ (nf, 2L) -> (T, 2L), f32 accum.
    g = jnp.dot(v_ref[...], wg_ref[...],
                preferred_element_type=jnp.float32) + bg_ref[...]
    a_v = jnp.tanh(g[:, :L])            # EUP
    a_u = jax.nn.sigmoid(g[:, L:])      # EUP
    gated = a_v * a_u                   # (T, L) f32, VPU

    # --- Instance scores directly in lane-dense row form:
    #     (1, L) contracted with (T, L) over L  ->  (1, T)
    scores_row = lax.dot_general(
        ww_ref[...], gated,
        dimension_numbers=(((1,), (1,)), ((), ())),
        preferred_element_type=jnp.float32) + bw_ref[...]          # (1, T)

    # --- Mask instances past the true bag size (only emitted for ragged N).
    if need_mask:
        col = i * tile_n + lax.broadcasted_iota(jnp.int32, (1, tile_n), 1)
        masked = jnp.where(col < n_valid, scores_row, -jnp.inf)
    else:
        masked = scores_row

    # --- Online softmax over the whole bag (grid axis is the reduction axis).
    m_prev = m_sc[...]
    m_new = jnp.maximum(m_prev, jnp.max(masked, axis=-1, keepdims=True))  # (1,1)
    alpha = jnp.exp(m_prev - m_new)                                       # (1,1)
    p = jnp.exp(masked - m_new)                                           # (1,T)
    l_sc[...] = alpha * l_sc[...] + jnp.sum(p, axis=-1, keepdims=True)
    acc_sc[...] = alpha * acc_sc[...] + jnp.dot(
        p, yhat_ref[...].astype(jnp.float32),
        preferred_element_type=jnp.float32)                               # (1,C)
    m_sc[...] = m_new

    # --- Per-instance sigmoid scores, lane-dense (1, T) store.
    scores_ref[...] = jax.nn.sigmoid(scores_row)

    @pl.when(i == pl.num_programs(0) - 1)
    def _finalize():
        # Runs once per call; exact reciprocal keeps 1e-5 parity with the f32
        # reference (approx=True would save nothing outside the hot loop).
        yprob_ref[...] = acc_sc[...] * pl.reciprocal(l_sc[...], approx=False)


def linear_classifier_forward(v, y_hat, params, *, tile_n=512,
                              compute_dtype=jnp.float32):
    """v: (N, nf), y_hat: (N, C). Returns (Y_prob (1, C), instance_scores (N,)).

    compute_dtype: dtype fed to the MXU for v / fused-W / y_hat (bf16 halves the
    HBM traffic on v6e/v7x); softmax stats and accumulators stay f32.
    """
    N, nf = v.shape
    C = y_hat.shape[1]
    L = params["wv"].shape[1]

    # Fuse the two gating linears: one (nf, 2L) weight, one (1, 2L) bias.
    wg = jnp.concatenate([params["wv"], params["wu"]], axis=1)
    bg = jnp.concatenate([params["bv"], params["bu"]]).reshape(1, 2 * L)
    ww = params["ww"].reshape(1, L).astype(jnp.float32)
    bw = params["bw"].reshape(1, 1).astype(jnp.float32)

    # Tile sizing: big enough (>=128 rows) to amortize ~0.35us/step grid
    # overhead, small enough that double-buffered tiles stay far below the
    # v7x 64 MiB VMEM (default tile_n=512 -> a few MiB even for nf ~ 2-4K).
    if N <= tile_n:
        tile_n = _round_up(N, 8)            # single grid step, full block
    else:
        tile_n = _round_up(tile_n, 128)     # lane-dense (1, tile_n) score store
    n_pad = _round_up(N, tile_n)
    grid = (n_pad // tile_n,)

    # Pad the instance axis; padded rows are masked inside the kernel.
    if n_pad != N:
        v = jnp.pad(v, ((0, n_pad - N), (0, 0)))
        y_hat = jnp.pad(y_hat, ((0, n_pad - N), (0, 0)))

    v = v.astype(compute_dtype)
    wg = wg.astype(compute_dtype)
    y_hat = y_hat.astype(compute_dtype)
    bg = bg.astype(jnp.float32)

    flops = (2 * n_pad * nf * 2 * L      # fused gating matmul
             + 3 * n_pad * L             # gate product + score contraction
             + 2 * n_pad * C)            # attention-weighted y_hat
    transcendentals = n_pad * (2 * L + 2)    # tanh, sigmoid, exp, sigmoid(score)
    bytes_accessed = (v.size * v.dtype.itemsize
                      + y_hat.size * y_hat.dtype.itemsize
                      + wg.size * wg.dtype.itemsize
                      + (bg.size + ww.size + bw.size) * 4
                      + (n_pad + C) * 4)

    kernel = functools.partial(_classifier_kernel, n_valid=N,
                               need_mask=(n_pad != N))

    yprob, scores = pl.pallas_call(
        kernel,
        out_shape=(
            jax.ShapeDtypeStruct((1, C), jnp.float32),
            jax.ShapeDtypeStruct((1, n_pad), jnp.float32),
        ),
        grid_spec=pltpu.PrefetchScalarGridSpec(
            num_scalar_prefetch=0,
            grid=grid,
            in_specs=[
                pl.BlockSpec((tile_n, nf), lambda i: (i, 0)),    # v tile
                pl.BlockSpec((nf, 2 * L), lambda i: (0, 0)),     # fused Wv|Wu
                pl.BlockSpec((1, 2 * L), lambda i: (0, 0)),      # fused bias
                pl.BlockSpec((1, L), lambda i: (0, 0)),          # Ww row
                pl.BlockSpec((1, 1), lambda i: (0, 0)),          # bw
                pl.BlockSpec((tile_n, C), lambda i: (i, 0)),     # y_hat tile
            ],
            out_specs=(
                pl.BlockSpec((1, C), lambda i: (0, 0)),          # Y_prob (resident)
                pl.BlockSpec((1, tile_n), lambda i: (0, i)),     # sigmoid scores
            ),
            scratch_shapes=[
                pltpu.VMEM((1, 1), jnp.float32),   # running max
                pltpu.VMEM((1, 1), jnp.float32),   # running softmax denom
                pltpu.VMEM((1, C), jnp.float32),   # weighted y_hat accumulator
            ],
        ),
        compiler_params=pltpu.CompilerParams(
            dimension_semantics=("arbitrary",),    # online-softmax reduction axis
            vmem_limit_bytes=32 * 1024 * 1024,
        ),
        cost_estimate=pl.CostEstimate(
            flops=flops,
            transcendentals=transcendentals,
            bytes_accessed=bytes_accessed),
    )(v, wg, bg, ww, bw, y_hat)

    # PyTorch: instance_scores.squeeze() -> (N,)
    return yprob, scores[0, :N]


def init_params(key, nf, L=256, num_classes=1):
    """Deterministic init mimicking nn.Linear (uniform +/- 1/sqrt(fan_in)).
    Weights stored as (in, out) = transpose of PyTorch layout."""
    ks = jax.random.split(key, 8)

    def lin(kw, kb, fan_in, fan_out):
        bound = 1.0 / jnp.sqrt(float(fan_in))
        w = jax.random.uniform(kw, (fan_in, fan_out), jnp.float32, -bound, bound)
        b = jax.random.uniform(kb, (fan_out,), jnp.float32, -bound, bound)
        return w, b

    wv, bv = lin(ks[0], ks[1], nf, L)          # attention_V
    wu, bu = lin(ks[2], ks[3], nf, L)          # attention_U
    ww, bw = lin(ks[4], ks[5], L, 1)           # attention_W
    # TODO(synk): self.fc exists in __init__ but is unused in forward; params kept for parity only.
    wfc, bfc = lin(ks[6], ks[7], nf, num_classes)
    return {"wv": wv, "bv": bv, "wu": wu, "bu": bu,
            "ww": ww, "bw": bw, "wfc": wfc, "bfc": bfc}


if __name__ == "__main__":
    key = jax.random.PRNGKey(0)
    k_param, k_v, k_y = jax.random.split(key, 3)

    N, nf, L, C = 300, 32, 256, 1              # N instances in the bag
    params = init_params(k_param, nf, L=L, num_classes=C)

    v = jax.random.normal(k_v, (N, nf), jnp.float32)
    y_hat = jax.random.normal(k_y, (N, C), jnp.float32)

    # f32 path; tile_n=128 -> 3-step grid with a masked ragged tail (300 -> 384).
    y_prob, inst_scores = linear_classifier_forward(
        v, y_hat, params, tile_n=128, compute_dtype=jnp.float32)
    jax.block_until_ready((y_prob, inst_scores))

    # Pure-JAX reference check
    a_v = jnp.tanh(v @ params["wv"] + params["bv"])
    a_u = jax.nn.sigmoid(v @ params["wu"] + params["bu"])
    s = (a_v * a_u) @ params["ww"] + params["bw"]           # (N, 1)
    A = jax.nn.softmax(s.T, axis=1)                         # (1, N)
    y_prob_ref = A @ y_hat                                  # (1, C)
    inst_ref = jax.nn.sigmoid(s.squeeze())

    assert y_prob.shape == (1, C) and inst_scores.shape == (N,)
    assert jnp.allclose(y_prob, y_prob_ref, atol=1e-5, rtol=1e-5)
    assert jnp.allclose(inst_scores, inst_ref, atol=1e-5, rtol=1e-5)

    # Single-tile path (N fits in one block; exercises the mask-elided branch).
    y_prob_1t, inst_1t = linear_classifier_forward(
        v, y_hat, params, tile_n=512, compute_dtype=jnp.float32)
    jax.block_until_ready((y_prob_1t, inst_1t))
    assert jnp.allclose(y_prob_1t, y_prob_ref, atol=1e-5, rtol=1e-5)
    assert jnp.allclose(inst_1t, inst_ref, atol=1e-5, rtol=1e-5)

    # bf16 MXU-operand path (the v6e/v7x recommendation); looser tolerance since
    # the reference is f32 end-to-end.
    y_prob_bf, inst_bf = linear_classifier_forward(
        v, y_hat, params, tile_n=128, compute_dtype=jnp.bfloat16)
    jax.block_until_ready((y_prob_bf, inst_bf))
    assert jnp.allclose(y_prob_bf, y_prob_ref, atol=5e-2, rtol=5e-2)
    assert jnp.allclose(inst_bf, inst_ref, atol=5e-2, rtol=5e-2)

    print("KERNEL_OK")
</pallas_src>

<mosaic_0001>
module attributes {stable_mosaic.version = 11 : i64} {
  func.func @_classifier_kernel(%arg0: i32, %arg1: memref<128x32xf32, #tpu.memory_space<vmem>>, %arg2: memref<32x512xf32, #tpu.memory_space<vmem>>, %arg3: memref<1x512xf32, #tpu.memory_space<vmem>>, %arg4: memref<1x256xf32, #tpu.memory_space<vmem>>, %arg5: memref<1x1xf32, #tpu.memory_space<vmem>>, %arg6: memref<128x1xf32, #tpu.memory_space<vmem>>, %arg7: memref<1x1xf32, #tpu.memory_space<vmem>>, %arg8: memref<1x128xf32, #tpu.memory_space<vmem>>, %arg9: memref<1x1xf32, #tpu.memory_space<vmem>>, %arg10: memref<1x1xf32, #tpu.memory_space<vmem>>, %arg11: memref<1x1xf32, #tpu.memory_space<vmem>>) attributes {dimension_semantics = [#tpu.dimension_semantics<arbitrary>], iteration_bounds = array<i64: 3>, scalar_prefetch = 0 : i64, scratch_operands = 3 : i64, tpu.core_type = #tpu.core_type<tc>, window_params = [{transform_indices = @transform_0, window_bounds = array<i64: 128, 32>}, {pipeline_mode = #tpu.pipeline_mode<synchronous>, transform_indices = @transform_1, window_bounds = array<i64: 32, 512>}, {pipeline_mode = #tpu.pipeline_mode<synchronous>, transform_indices = @transform_2, window_bounds = array<i64: 1, 512>}, {pipeline_mode = #tpu.pipeline_mode<synchronous>, transform_indices = @transform_3, window_bounds = array<i64: 1, 256>}, {pipeline_mode = #tpu.pipeline_mode<synchronous>, transform_indices = @transform_4, window_bounds = array<i64: 1, 1>}, {transform_indices = @transform_5, window_bounds = array<i64: 128, 1>}, {pipeline_mode = #tpu.pipeline_mode<synchronous>, transform_indices = @transform_6, window_bounds = array<i64: 1, 1>}, {transform_indices = @transform_7, window_bounds = array<i64: 1, 128>}]} {
    %c0_i32 = arith.constant 0 : i32
    %0 = arith.cmpi eq, %arg0, %c0_i32 : i32
    %1 = arith.extui %0 : i1 to i32
    %c0_i32_0 = arith.constant 0 : i32
    %2 = arith.cmpi ne, %1, %c0_i32_0 : i32
    scf.if %2 {
      %cst_34 = arith.constant 0xFF800000 : f32
      %62 = vector.broadcast %cst_34 : f32 to vector<1x1xf32>
      %c0_35 = arith.constant 0 : index
      %c0_36 = arith.constant 0 : index
      %63 = vector.load %arg9[%c0_35, %c0_36] : memref<1x1xf32, #tpu.memory_space<vmem>>, vector<1x1xf32>
      tpu.vector_store %arg9[%c0_35, %c0_36], %62 {strides = array<i32>} : memref<1x1xf32, #tpu.memory_space<vmem>>, vector<1x1xf32>,
      %cst_37 = arith.constant 0.000000e+00 : f32
      %64 = vector.broadcast %cst_37 : f32 to vector<1x1xf32>
      %c0_38 = arith.constant 0 : index
      %c0_39 = arith.constant 0 : index
      %65 = vector.load %arg10[%c0_38, %c0_39] : memref<1x1xf32, #tpu.memory_space<vmem>>, vector<1x1xf32>
      tpu.vector_store %arg10[%c0_38, %c0_39], %64 {strides = array<i32>} : memref<1x1xf32, #tpu.memory_space<vmem>>, vector<1x1xf32>,
      %cst_40 = arith.constant 0.000000e+00 : f32
      %66 = vector.broadcast %cst_40 : f32 to vector<1x1xf32>
      %c0_41 = arith.constant 0 : index
      %c0_42 = arith.constant 0 : index
      %67 = vector.load %arg11[%c0_41, %c0_42] : memref<1x1xf32, #tpu.memory_space<vmem>>, vector<1x1xf32>
      tpu.vector_store %arg11[%c0_41, %c0_42], %66 {strides = array<i32>} : memref<1x1xf32, #tpu.memory_space<vmem>>, vector<1x1xf32>,
    } else {
    }
    %c0 = arith.constant 0 : index
    %c0_1 = arith.constant 0 : index
    %3 = vector.load %arg1[%c0, %c0_1] : memref<128x32xf32, #tpu.memory_space<vmem>>, vector<128x32xf32>
    %c0_2 = arith.constant 0 : index
    %c0_3 = arith.constant 0 : index
    %4 = vector.load %arg2[%c0_2, %c0_3] : memref<32x512xf32, #tpu.memory_space<vmem>>, vector<32x512xf32>
    %cst = arith.constant dense<0.000000e+00> : vector<128x512xf32>
    %5 = tpu.matmul %3, %4, %cst {dimension_numbers = #tpu.dot_dimension_numbers<[1], [0], [0], [1], [0, 0, 1, 1], [], []>} : vector<128x32xf32>, vector<32x512xf32>, vector<128x512xf32> -> vector<128x512xf32>
    %c0_4 = arith.constant 0 : index
    %c0_5 = arith.constant 0 : index
    %6 = vector.load %arg3[%c0_4, %c0_5] : memref<1x512xf32, #tpu.memory_space<vmem>>, vector<1x512xf32>
    %7 = vector.broadcast %6 : vector<1x512xf32> to vector<128x512xf32>
    %8 = arith.addf %5, %7 : vector<128x512xf32>
    %9 = vector.extract_strided_slice %8 {offsets = [0, 0], sizes = [128, 256], strides = [1, 1]} : vector<128x512xf32> to vector<128x256xf32>
    %10 = math.tanh %9 : vector<128x256xf32>
    %11 = vector.extract_strided_slice %8 {offsets = [0, 256], sizes = [128, 256], strides = [1, 1]} : vector<128x512xf32> to vector<128x256xf32>
    %12 = arith.negf %11 : vector<128x256xf32>
    %13 = math.exp %12 : vector<128x256xf32>
    %cst_6 = arith.constant 1.000000e+00 : f32
    %14 = vector.broadcast %cst_6 : f32 to vector<128x256xf32>
    %15 = arith.addf %14, %13 : vector<128x256xf32>
    %16 = arith.divf %14, %15 : vector<128x256xf32>
    %17 = arith.mulf %10, %16 : vector<128x256xf32>
    %c0_7 = arith.constant 0 : index
    %c0_8 = arith.constant 0 : index
    %18 = vector.load %arg4[%c0_7, %c0_8] : memref<1x256xf32, #tpu.memory_space<vmem>>, vector<1x256xf32>
    %cst_9 = arith.constant dense<0.000000e+00> : vector<1x128xf32>
    %19 = tpu.matmul %18, %17, %cst_9 {dimension_numbers = #tpu.dot_dimension_numbers<[1], [1], [0], [0], [0, 0, 1, 0], [], []>} : vector<1x256xf32>, vector<128x256xf32>, vector<1x128xf32> -> vector<1x128xf32>
    %c0_10 = arith.constant 0 : index
    %c0_11 = arith.constant 0 : index
    %20 = vector.load %arg5[%c0_10, %c0_11] : memref<1x1xf32, #tpu.memory_space<vmem>>, vector<1x1xf32>
    %21 = vector.broadcast %20 : vector<1x1xf32> to vector<1x128xf32>
    %22 = arith.addf %19, %21 : vector<1x128xf32>
    %c128_i32 = arith.constant 128 : i32
    %23 = arith.muli %arg0, %c128_i32 : i32
    %24 = tpu.iota {dimensions = array<i32: 1>} : vector<1x128xi32>
    %25 = vector.broadcast %23 : i32 to vector<1x128xi32>
    %26 = arith.addi %25, %24 : vector<1x128xi32>
    %c300_i32 = arith.constant 300 : i32
    %27 = vector.broadcast %c300_i32 : i32 to vector<1x128xi32>
    %28 = arith.cmpi slt, %26, %27 : vector<1x128xi32>
    %cst_12 = arith.constant 0xFF800000 : f32
    %29 = vector.broadcast %cst_12 : f32 to vector<1x128xf32>
    %30 = arith.select %28, %22, %29 : vector<1x128xi1>, vector<1x128xf32>
    %c0_13 = arith.constant 0 : index
    %c0_14 = arith.constant 0 : index
    %31 = vector.load %arg9[%c0_13, %c0_14] : memref<1x1xf32, #tpu.memory_space<vmem>>, vector<1x1xf32>
    %cst_15 = arith.constant dense<0xFF800000> : vector<1xf32>
    %32 = vector.multi_reduction <maximumf>, %30, %cst_15 [1] : vector<1x128xf32> to vector<1xf32>
    %33 = vector.shape_cast %32 : vector<1xf32> to vector<1x1xf32>
    %34 = arith.maximumf %31, %33 : vector<1x1xf32>
    %35 = arith.subf %31, %34 : vector<1x1xf32>
    %36 = math.exp %35 : vector<1x1xf32>
    %37 = vector.broadcast %34 : vector<1x1xf32> to vector<1x128xf32>
    %38 = arith.subf %30, %37 : vector<1x128xf32>
    %39 = math.exp %38 : vector<1x128xf32>
    %c0_16 = arith.constant 0 : index
    %c0_17 = arith.constant 0 : index
    %40 = vector.load %arg10[%c0_16, %c0_17] : memref<1x1xf32, #tpu.memory_space<vmem>>, vector<1x1xf32>
    %41 = arith.mulf %36, %40 : vector<1x1xf32>
    %cst_18 = arith.constant dense<0.000000e+00> : vector<1xf32>
    %42 = vector.multi_reduction <add>, %39, %cst_18 [1] : vector<1x128xf32> to vector<1xf32>
    %43 = vector.shape_cast %42 : vector<1xf32> to vector<1x1xf32>
    %44 = arith.addf %41, %43 : vector<1x1xf32>
    %c0_19 = arith.constant 0 : index
    %c0_20 = arith.constant 0 : index
    %45 = vector.load %arg10[%c0_19, %c0_20] : memref<1x1xf32, #tpu.memory_space<vmem>>, vector<1x1xf32>
    tpu.vector_store %arg10[%c0_19, %c0_20], %44 {strides = array<i32>} : memref<1x1xf32, #tpu.memory_space<vmem>>, vector<1x1xf32>,
    %c0_21 = arith.constant 0 : index
    %c0_22 = arith.constant 0 : index
    %46 = vector.load %arg11[%c0_21, %c0_22] : memref<1x1xf32, #tpu.memory_space<vmem>>, vector<1x1xf32>
    %47 = arith.mulf %36, %46 : vector<1x1xf32>
    %c0_23 = arith.constant 0 : index
    %c0_24 = arith.constant 0 : index
    %48 = vector.load %arg6[%c0_23, %c0_24] : memref<128x1xf32, #tpu.memory_space<vmem>>, vector<128x1xf32>
    %cst_25 = arith.constant dense<0.000000e+00> : vector<1x1xf32>
    %49 = tpu.matmul %39, %48, %cst_25 {dimension_numbers = #tpu.dot_dimension_numbers<[1], [0], [0], [1], [0, 0, 1, 1], [], []>} : vector<1x128xf32>, vector<128x1xf32>, vector<1x1xf32> -> vector<1x1xf32>
    %50 = arith.addf %47, %49 : vector<1x1xf32>
    %c0_26 = arith.constant 0 : index
    %c0_27 = arith.constant 0 : index
    %51 = vector.load %arg11[%c0_26, %c0_27] : memref<1x1xf32, #tpu.memory_space<vmem>>, vector<1x1xf32>
    tpu.vector_store %arg11[%c0_26, %c0_27], %50 {strides = array<i32>} : memref<1x1xf32, #tpu.memory_space<vmem>>, vector<1x1xf32>,
    %c0_28 = arith.constant 0 : index
    %c0_29 = arith.constant 0 : index
    %52 = vector.load %arg9[%c0_28, %c0_29] : memref<1x1xf32, #tpu.memory_space<vmem>>, vector<1x1xf32>
    tpu.vector_store %arg9[%c0_28, %c0_29], %34 {strides = array<i32>} : memref<1x1xf32, #tpu.memory_space<vmem>>, vector<1x1xf32>,
    %53 = arith.negf %22 : vector<1x128xf32>
    %54 = math.exp %53 : vector<1x128xf32>
    %cst_30 = arith.constant 1.000000e+00 : f32
    %55 = vector.broadcast %cst_30 : f32 to vector<1x128xf32>
    %56 = arith.addf %55, %54 : vector<1x128xf32>
    %57 = arith.divf %55, %56 : vector<1x128xf32>
    %c0_31 = arith.constant 0 : index
    %c0_32 = arith.constant 0 : index
    %58 = vector.load %arg8[%c0_31, %c0_32] : memref<1x128xf32, #tpu.memory_space<vmem>>, vector<1x128xf32>
    tpu.vector_store %arg8[%c0_31, %c0_32], %57 {strides = array<i32>} : memref<1x128xf32, #tpu.memory_space<vmem>>, vector<1x128xf32>,
    %c2_i32 = arith.constant 2 : i32
    %59 = arith.cmpi eq, %arg0, %c2_i32 : i32
    %60 = arith.extui %59 : i1 to i32
    %c0_i32_33 = arith.constant 0 : i32
    %61 = arith.cmpi ne, %60, %c0_i32_33 : i32
    scf.if %61 {
      %c0_34 = arith.constant 0 : index
      %c0_35 = arith.constant 0 : index
      %62 = vector.load %arg11[%c0_34, %c0_35] : memref<1x1xf32, #tpu.memory_space<vmem>>, vector<1x1xf32>
      %c0_36 = arith.constant 0 : index
      %c0_37 = arith.constant 0 : index
      %63 = vector.load %arg10[%c0_36, %c0_37] : memref<1x1xf32, #tpu.memory_space<vmem>>, vector<1x1xf32>
      %64 = tpu.reciprocal %63 : vector<1x1xf32> -> vector<1x1xf32>
      %65 = arith.mulf %62, %64 : vector<1x1xf32>
      %c0_38 = arith.constant 0 : index
      %c0_39 = arith.constant 0 : index
      %66 = vector.load %arg7[%c0_38, %c0_39] : memref<1x1xf32, #tpu.memory_space<vmem>>, vector<1x1xf32>
      tpu.vector_store %arg7[%c0_38, %c0_39], %65 {strides = array<i32>} : memref<1x1xf32, #tpu.memory_space<vmem>>, vector<1x1xf32>,
    } else {
    }
    return
  }
  func.func @transform_0(%arg0: i32) -> (i32, i32) {
    %c0_i32 = arith.constant 0 : i32
    %c0_i32_0 = arith.constant 0 : i32
    return %arg0, %c0_i32 : i32, i32
  }
  func.func @transform_1(%arg0: i32) -> (i32, i32) {
    %c0_i32 = arith.constant 0 : i32
    %c0_i32_0 = arith.constant 0 : i32
    %c0_i32_1 = arith.constant 0 : i32
    return %c0_i32, %c0_i32_0 : i32, i32
  }
  func.func @transform_2(%arg0: i32) -> (i32, i32) {
    %c0_i32 = arith.constant 0 : i32
    %c0_i32_0 = arith.constant 0 : i32
    %c0_i32_1 = arith.constant 0 : i32
    return %c0_i32, %c0_i32_0 : i32, i32
  }
  func.func @transform_3(%arg0: i32) -> (i32, i32) {
    %c0_i32 = arith.constant 0 : i32
    %c0_i32_0 = arith.constant 0 : i32
    %c0_i32_1 = arith.constant 0 : i32
    return %c0_i32, %c0_i32_0 : i32, i32
  }
  func.func @transform_4(%arg0: i32) -> (i32, i32) {
    %c0_i32 = arith.constant 0 : i32
    %c0_i32_0 = arith.constant 0 : i32
    %c0_i32_1 = arith.constant 0 : i32
    return %c0_i32, %c0_i32_0 : i32, i32
  }
  func.func @transform_5(%arg0: i32) -> (i32, i32) {
    %c0_i32 = arith.constant 0 : i32
    %c0_i32_0 = arith.constant 0 : i32
    return %arg0, %c0_i32 : i32, i32
  }
  func.func @transform_6(%arg0: i32) -> (i32, i32) {
    %c0_i32 = arith.constant 0 : i32
    %c0_i32_0 = arith.constant 0 : i32
    %c0_i32_1 = arith.constant 0 : i32
    return %c0_i32, %c0_i32_0 : i32, i32
  }
  func.func @transform_7(%arg0: i32) -> (i32, i32) {
    %c0_i32 = arith.constant 0 : i32
    %c0_i32_0 = arith.constant 0 : i32
    return %c0_i32, %arg0 : i32, i32
  }
}

</mosaic_0001>

<llo_original>
// kernel: tpu_custom_call.1
$region0: #{tpu_custom_call.1}
  #allocation0 [shape = 'u32[]', space=smem, size = 0x4, offset = 0x4, fixed_abs, tag = 'smem constant byte address 0x4 - core index']
  #allocation1 [shape = 'u32[144,128]{1,0:T(1,128)}', space=vmem, size = 0x12000, scoped, tag = 'internal scratch']
  #allocation2 [shape = 'f32[1,1]{1,0:T(1,128)}', space=vmem, size = 0x200, scoped, tag = 'scratch operand']
  #allocation3 [shape = 'f32[1,1]{1,0:T(1,128)}', space=vmem, size = 0x200, scoped, tag = 'scratch operand']
  #allocation4 [shape = 'f32[1,1]{1,0:T(1,128)}', space=vmem, size = 0x200, scoped, tag = 'scratch operand']
  #allocation5 [shape = 'f32[1,1]{1,0:T(1,128)S(1)}', space=vmem, size = 0x200, scoped, tag = 'scoped memory for tpu_custom_call.1']
  %s0 = inlined_call_operand.vmem [shape: f32[384,32], index: 0, kind: input, shape index: {}]
  %s1 = inlined_call_operand.vmem [shape: f32[32,512], index: 1, kind: input, shape index: {}]
  %s2 = inlined_call_operand.vmem [shape: f32[1,512], index: 2, kind: input, shape index: {}]
  %s3 = inlined_call_operand.vmem [shape: f32[1,256], index: 3, kind: input, shape index: {}]
  %s4 = inlined_call_operand.<no memory space> [shape: f32[1,1], index: 4, kind: input, shape index: {}]
  %s5 = inlined_call_operand.vmem [shape: f32[384,1], index: 5, kind: input, shape index: {}]
  %s6 = inlined_call_operand.hbm [shape: f32[1,1], index: 6, kind: output, shape index: {0}]
  %s7 = inlined_call_operand.hbm [shape: f32[1,384], index: 7, kind: output, shape index: {1}]
  %8 = xla_tuple %s6, %s7
  %s9 = sld [smem:[#allocation0]]
  $region73: #{tpu_custom_call.1} parent=0
    _
  %s11 = ssub.s32 1, %s9
  %s12 = scalar_select 0, %s11, %s9
  %v13 = vstv %s4
  %14 = vst [vmem:[#allocation5] sm:$0x1] %v13
  $region1: #{tpu_custom_call.1} parent=0
    #allocation6 [shape = 'u8[512]{0}', space=vmem, size = 0x400, scoped, tag = 'output window, operand 0, single buffered']
    #allocation7 [shape = 's32[2]{0}', space=sflag, size = 0x8, scoped, tag = 'scoped memory for tpu_custom_call.1']
    #allocation8 [shape = 'u8[1024]{0}', space=vmem, size = 0x400, scoped, tag = 'output window, operand 1']
    #allocation9 [shape = 's32[2]{0}', space=sflag, size = 0x8, scoped, tag = 'scoped memory for tpu_custom_call.1']
    %15 = vsyncpa [#allocation7], 0
    %16 = vsyncpa [#allocation9], 0
    %s17 = scalar_lea.sflag [#allocation9], 1
    %18 = vsyncpa %s17, 0
    loop: start=0, step=1, limit=5
    $region2: #{tpu_custom_call.1} parent=1 // loop_pre_header
      _
    $region3: #{tpu_custom_call.1} parent=1 // loop_header
      %s20 = sphi 0, %s24
      %p21 = scmp.ge.s32.totalorder %s20, 5
      %s30 = sphi 0, %s32
      %s33 = sphi 0, %s30
      %s34 = sphi 0, %s33
      %s50 = sphi 0, %s34
      %s54 = sphi 0, %s54
      %s56 = sphi 0, %s54
      %s57 = sphi 0, %s56
      %s71 = sphi 0, %s57
      %s75 = sphi 0, %s75
      %s77 = sphi 0, %s75
      %s78 = sphi 0, %s77
      %s92 = sphi 0, %s78
      %s96 = sphi 0, %s96
      %s98 = sphi 0, %s96
      %s99 = sphi 0, %s98
      %s113 = sphi 0, %s99
      %s117 = sphi 0, %s117
      %s119 = sphi 0, %s117
      %s120 = sphi 0, %s119
      %s134 = sphi 0, %s120
      %s140 = sphi 0, %s142
      %s143 = sphi 0, %s140
      %s144 = sphi 0, %s143
      %s160 = sphi 0, %s144
      %s164 = sphi 0, %s164
      %s166 = sphi 0, %s164
      %s167 = sphi 0, %s166
      %s181 = sphi 0, %s167
      %s187 = sphi 0, %s189
      %s190 = sphi 0, %s187
      %s191 = sphi 0, %s190
      %s207 = sphi 0, %s191
    $region4: #{tpu_custom_call.1} parent=1 // loop_header_branch
      %23 = sbr.rel (%p21) target = $region8
    $region5: #{tpu_custom_call.1} parent=1 // loop_body
      %s25 = ssub.s32 %s20, 1
      %s26 = ssub.s32 %s20, 2
      %s27 = sadd.s32 %s20, 1
      %s28 = ssub.s32 %s20, %s27
      %p29 = scmp.eq.s32.totalorder %s28, 0
      %s31 = sadd.s32 %s30, 1
      %s32 = scalar_select %p29, %s30, %s31
      %p35 = pneg %p29
      %p36 = scmp.eq.s32.totalorder %s20, 2
      %p37 = por %p35, %p36
      %p38 = scmp.ne.s32.totalorder %s30, %s33
      %p39 = scmp.eq.s32.totalorder %s20, 0
      %p40 = por %p38, %p39
      %p41 = scmp.ne.s32.totalorder %s30, %s33
      %p42 = scmp.eq.s32.totalorder %s25, 2
      %p43 = por %p41, %p42
      %p44 = scmp.ne.s32.totalorder %s33, %s34
      %p45 = scmp.eq.s32.totalorder %s25, 0
      %p46 = por %p44, %p45
      %p47 = scmp.ne.s32.totalorder %s33, %s34
      %p48 = scmp.eq.s32.totalorder %s26, 2
      %p49 = por %p47, %p48
      %p51 = scmp.ne.s32.totalorder %s34, %s50
      %p52 = scmp.eq.s32.totalorder %s26, 0
      %p53 = por %p51, %p52
      %s55 = sadd.s32 %s54, 1
      %p58 = scmp.eq.s32.totalorder %s20, 2
      %p59 = scmp.ne.s32.totalorder %s54, %s56
      %p60 = scmp.eq.s32.totalorder %s20, 0
      %p61 = por %p59, %p60
      %p62 = scmp.ne.s32.totalorder %s54, %s56
      %p63 = scmp.eq.s32.totalorder %s25, 2
      %p64 = por %p62, %p63
      %p65 = scmp.ne.s32.totalorder %s56, %s57
      %p66 = scmp.eq.s32.totalorder %s25, 0
      %p67 = por %p65, %p66
      %p68 = scmp.ne.s32.totalorder %s56, %s57
      %p69 = scmp.eq.s32.totalorder %s26, 2
      %p70 = por %p68, %p69
      %p72 = scmp.ne.s32.totalorder %s57, %s71
      %p73 = scmp.eq.s32.totalorder %s26, 0
      %p74 = por %p72, %p73
      %s76 = sadd.s32 %s75, 1
      %p79 = scmp.eq.s32.totalorder %s20, 2
      %p80 = scmp.ne.s32.totalorder %s75, %s77
      %p81 = scmp.eq.s32.totalorder %s20, 0
      %p82 = por %p80, %p81
      %p83 = scmp.ne.s32.totalorder %s75, %s77
      %p84 = scmp.eq.s32.totalorder %s25, 2
      %p85 = por %p83, %p84
      %p86 = scmp.ne.s32.totalorder %s77, %s78
      %p87 = scmp.eq.s32.totalorder %s25, 0
      %p88 = por %p86, %p87
      %p89 = scmp.ne.s32.totalorder %s77, %s78
      %p90 = scmp.eq.s32.totalorder %s26, 2
      %p91 = por %p89, %p90
      %p93 = scmp.ne.s32.totalorder %s78, %s92
      %p94 = scmp.eq.s32.totalorder %s26, 0
      %p95 = por %p93, %p94
      %s97 = sadd.s32 %s96, 1
      %p100 = scmp.eq.s32.totalorder %s20, 2
      %p101 = scmp.ne.s32.totalorder %s96, %s98
      %p102 = scmp.eq.s32.totalorder %s20, 0
      %p103 = por %p101, %p102
      %p104 = scmp.ne.s32.totalorder %s96, %s98
      %p105 = scmp.eq.s32.totalorder %s25, 2
      %p106 = por %p104, %p105
      %p107 = scmp.ne.s32.totalorder %s98, %s99
      %p108 = scmp.eq.s32.totalorder %s25, 0
      %p109 = por %p107, %p108
      %p110 = scmp.ne.s32.totalorder %s98, %s99
      %p111 = scmp.eq.s32.totalorder %s26, 2
      %p112 = por %p110, %p111
      %p114 = scmp.ne.s32.totalorder %s99, %s113
      %p115 = scmp.eq.s32.totalorder %s26, 0
      %p116 = por %p114, %p115
      %s118 = sadd.s32 %s117, 1
      %p121 = scmp.eq.s32.totalorder %s20, 2
      %p122 = scmp.ne.s32.totalorder %s117, %s119
      %p123 = scmp.eq.s32.totalorder %s20, 0
      %p124 = por %p122, %p123
      %p125 = scmp.ne.s32.totalorder %s117, %s119
      %p126 = scmp.eq.s32.totalorder %s25, 2
      %p127 = por %p125, %p126
      %p128 = scmp.ne.s32.totalorder %s119, %s120
      %p129 = scmp.eq.s32.totalorder %s25, 0
      %p130 = por %p128, %p129
      %p131 = scmp.ne.s32.totalorder %s119, %s120
      %p132 = scmp.eq.s32.totalorder %s26, 2
      %p133 = por %p131, %p132
      %p135 = scmp.ne.s32.totalorder %s120, %s134
      %p136 = scmp.eq.s32.totalorder %s26, 0
      %p137 = por %p135, %p136
      %s138 = ssub.s32 %s20, %s27
      %p139 = scmp.eq.s32.totalorder %s138, 0
      %s141 = sadd.s32 %s140, 1
      %s142 = scalar_select %p139, %s140, %s141
      %p145 = pneg %p139
      %p146 = scmp.eq.s32.totalorder %s20, 2
      %p147 = por %p145, %p146
      %p148 = scmp.ne.s32.totalorder %s140, %s143
      %p149 = scmp.eq.s32.totalorder %s20, 0
      %p150 = por %p148, %p149
      %p151 = scmp.ne.s32.totalorder %s140, %s143
      %p152 = scmp.eq.s32.totalorder %s25, 2
      %p153 = por %p151, %p152
      %p154 = scmp.ne.s32.totalorder %s143, %s144
      %p155 = scmp.eq.s32.totalorder %s25, 0
      %p156 = por %p154, %p155
      %p157 = scmp.ne.s32.totalorder %s143, %s144
      %p158 = scmp.eq.s32.totalorder %s26, 2
      %p159 = por %p157, %p158
      %p161 = scmp.ne.s32.totalorder %s144, %s160
      %p162 = scmp.eq.s32.totalorder %s26, 0
      %p163 = por %p161, %p162
      %s165 = sadd.s32 %s164, 1
      %p168 = scmp.eq.s32.totalorder %s20, 2
      %p169 = scmp.ne.s32.totalorder %s164, %s166
      %p170 = scmp.eq.s32.totalorder %s20, 0
      %p171 = por %p169, %p170
      %p172 = scmp.ne.s32.totalorder %s164, %s166
      %p173 = scmp.eq.s32.totalorder %s25, 2
      %p174 = por %p172, %p173
      %p175 = scmp.ne.s32.totalorder %s166, %s167
      %p176 = scmp.eq.s32.totalorder %s25, 0
      %p177 = por %p175, %p176
      %p178 = scmp.ne.s32.totalorder %s166, %s167
      %p179 = scmp.eq.s32.totalorder %s26, 2
      %p180 = por %p178, %p179
      %p182 = scmp.ne.s32.totalorder %s167, %s181
      %p183 = scmp.eq.s32.totalorder %s26, 0
      %p184 = por %p182, %p183
      %s185 = ssub.s32 %s20, %s27
      %p186 = scmp.eq.s32.totalorder %s185, 0
      %s188 = sadd.s32 %s187, 1
      %s189 = scalar_select %p186, %s187, %s188
      %p192 = pneg %p186
      %p193 = scmp.eq.s32.totalorder %s20, 2
      %p194 = por %p192, %p193
      %p195 = scmp.ne.s32.totalorder %s187, %s190
      %p196 = scmp.eq.s32.totalorder %s20, 0
      %p197 = por %p195, %p196
      %p198 = scmp.ne.s32.totalorder %s187, %s190
      %p199 = scmp.eq.s32.totalorder %s25, 2
      %p200 = por %p198, %p199
      %p201 = scmp.ne.s32.totalorder %s190, %s191
      %p202 = scmp.eq.s32.totalorder %s25, 0
      %p203 = por %p201, %p202
      %p204 = scmp.ne.s32.totalorder %s190, %s191
      %p205 = scmp.eq.s32.totalorder %s26, 2
      %p206 = por %p204, %p205
      %p208 = scmp.ne.s32.totalorder %s191, %s207
      %p209 = scmp.eq.s32.totalorder %s26, 0
      %p210 = por %p208, %p209
      %p211 = scmp.le.s32.totalorder 1, %s20
      %p212 = scmp.lt.s32.totalorder %s20, 4
      %p213 = pnand %p211, %p212
      %p214 = pneg %p213
      // Predicated region
      $region9: #{tpu_custom_call.1} parent=5 // pred_check
        _
      $region10: #{tpu_custom_call.1} parent=5 // pred_check_branch
        %216 = sbr.rel (%p213) target = $region12
      $region11: #{tpu_custom_call.1} parent=5 // pred_region
        %s217 = ssub.s32 %s20, 1
        // Predicated region
        $region13: #{tpu_custom_call.1} parent=11 // pred_check
          %p218 = pneg %p67
        $region14: #{tpu_custom_call.1} parent=11 // pred_check_branch
          %220 = sbr.rel (%p218) target = $region16
        $region15: #{tpu_custom_call.1} parent=11 // pred_region
          _
        $region16: #{tpu_custom_call.1} parent=11 // pred_fallthru
          _
        // Predicated region
        $region17: #{tpu_custom_call.1} parent=11 // pred_check
          %p221 = pneg %p88
        $region18: #{tpu_custom_call.1} parent=11 // pred_check_branch
          %223 = sbr.rel (%p221) target = $region20
        $region19: #{tpu_custom_call.1} parent=11 // pred_region
          _
        $region20: #{tpu_custom_call.1} parent=11 // pred_fallthru
          _
        // Predicated region
        $region21: #{tpu_custom_call.1} parent=11 // pred_check
          %p224 = pneg %p109
        $region22: #{tpu_custom_call.1} parent=11 // pred_check_branch
          %226 = sbr.rel (%p224) target = $region24
        $region23: #{tpu_custom_call.1} parent=11 // pred_region
          _
        $region24: #{tpu_custom_call.1} parent=11 // pred_fallthru
          _
        // Predicated region
        $region25: #{tpu_custom_call.1} parent=11 // pred_check
          %p227 = pneg %p130
        $region26: #{tpu_custom_call.1} parent=11 // pred_check_branch
          %229 = sbr.rel (%p227) target = $region28
        $region27: #{tpu_custom_call.1} parent=11 // pred_region
          _
        $region28: #{tpu_custom_call.1} parent=11 // pred_fallthru
          _
      $region12: #{tpu_custom_call.1} parent=5 // pred_fallthru
        _
      %p230 = scmp.lt.s32.totalorder %s20, 3
      // Predicated region
      $region29: #{tpu_custom_call.1} parent=5 // pred_check
        %p231 = pneg %p230
      $region30: #{tpu_custom_call.1} parent=5 // pred_check_branch
        %233 = sbr.rel (%p231) target = $region32
      $region31: #{tpu_custom_call.1} parent=5 // pred_region
        // Predicated region
        $region33: #{tpu_custom_call.1} parent=31 // pred_check
          %p234 = pneg %p40
        $region34: #{tpu_custom_call.1} parent=31 // pred_check_branch
          %236 = sbr.rel (%p234) target = $region36
        $region35: #{tpu_custom_call.1} parent=31 // pred_region
          %s237 = smul.u32 16, %s20
          %p238 = scmp.lt.s32.totalorder %s237, 47
          %s239 = scalar_select %p238, %s237, 47
          %s240 = smul.addr %s239, 8
          %s241 = scalar_lea.vmem %s0, %s240
          %s242 = smul.u32 16, %s20
        $region36: #{tpu_custom_call.1} parent=31 // pred_fallthru
          _
        // Predicated region
        $region37: #{tpu_custom_call.1} parent=31 // pred_check
          %p243 = pneg %p150
        $region38: #{tpu_custom_call.1} parent=31 // pred_check_branch
          %245 = sbr.rel (%p243) target = $region40
        $region39: #{tpu_custom_call.1} parent=31 // pred_region
          %s246 = smul.u32 16, %s20
          %p247 = scmp.lt.s32.totalorder %s246, 47
          %s248 = scalar_select %p247, %s246, 47
          %s249 = smul.addr %s248, 8
          %s250 = scalar_lea.vmem %s5, %s249
          %s251 = smul.u32 16, %s20
        $region40: #{tpu_custom_call.1} parent=31 // pred_fallthru
          _
      $region32: #{tpu_custom_call.1} parent=5 // pred_fallthru
        _
      %p252 = scmp.le.s32.totalorder 1, %s20
      %p253 = scmp.lt.s32.totalorder %s20, 4
      %p254 = pnand %p252, %p253
      %p255 = pneg %p254
      // Predicated region
      $region41: #{tpu_custom_call.1} parent=5 // pred_check
        _
      $region42: #{tpu_custom_call.1} parent=5 // pred_check_branch
        %257 = sbr.rel (%p254) target = $region44
      $region43: #{tpu_custom_call.1} parent=5 // pred_region
        %s258 = ssub.s32 %s20, 1
        %s259 = smul.u32 16, %s25
        %p260 = scmp.lt.s32.totalorder %s259, 47
        %s261 = scalar_select %p260, %s259, 47
        %s262 = smul.addr %s261, 8
        %s263 = scalar_lea.vmem %s0, %s262
        %p264 = pneg %p46
        %p265 = pneg %p43
        %p266 = pneg %p67
        %p267 = pneg %p64
        %p268 = pneg %p88
        %p269 = pneg %p85
        %p270 = pneg %p109
        %p271 = pneg %p106
        %p272 = pneg %p130
        %p273 = pneg %p127
        %s274 = smul.u32 16, %s25
        %p275 = scmp.lt.s32.totalorder %s274, 47
        %s276 = scalar_select %p275, %s274, 47
        %s277 = smul.addr %s276, 8
        %s278 = scalar_lea.vmem %s5, %s277
        %p279 = pneg %p156
        %p280 = pneg %p153
        %p281 = pneg %p177
        %p282 = pneg %p174
        %p283 = pneg %p203
        %p284 = pneg %p200
        %s285 = sand.u32 %s190, 1
        %s286 = scalar_lea.sflag [#allocation9], %s285
        %s287 = sand.u32 %s190, 1
        %s288 = scalar_lea.vmem [#allocation8], %s287
        %s289 = smul.u32 16, %s25
        %p290 = scmp.lt.s32.totalorder %s289, 47
        %s291 = scalar_select %p290, %s289, 47
        %s292 = smul.addr %s291, 8
        %s293 = scalar_lea.vmem %s0, %s292
        %s294 = smul.u32 16, %s25
        %s295 = smul.u32 16, %s25
        %p296 = scmp.lt.s32.totalorder %s295, 47
        %s297 = scalar_select %p296, %s295, 47
        %s298 = smul.addr %s297, 8
        %s299 = scalar_lea.vmem %s5, %s298
        %s300 = smul.u32 16, %s25
        %p301 = scmp.eq.s32.totalorder %s25, 0
        // Predicated region
        $region45: #{tpu_custom_call.1} parent=43 // pred_check
          %p302 = pneg %p301
        $region46: #{tpu_custom_call.1} parent=43 // pred_check_branch
          %304 = sbr.rel (%p302) target = $region48
        $region47: #{tpu_custom_call.1} parent=43 // pred_region
          %vm305 = vcmask 0
          %306 = vst.msk [vmem:[#allocation2] sm:$0x1] %vm305, -inf
          %307 = vst.msk [vmem:[#allocation3] sm:$0x1] %vm305, 0.0
          %308 = vst.msk [vmem:[#allocation4] sm:$0x1] %vm305, 0.0
        $region48: #{tpu_custom_call.1} parent=43 // pred_fallthru
          _
        %v309 = vld [vmem:[%s293] sm:$0xff]
        %v310 = vld [vmem:[%s293 + $0x8] sm:$0xff]
        %v311 = vld [vmem:[%s293 + $0x10] sm:$0xff]
        %v312 = vld [vmem:[%s293 + $0x18] sm:$0xff]
        %v313 = vld [vmem:[%s293 + $0x20] sm:$0xff]
        %v314 = vld [vmem:[%s293 + $0x28] sm:$0xff]
        %v315 = vld [vmem:[%s293 + $0x30] sm:$0xff]
        %v316 = vld [vmem:[%s293 + $0x38] sm:$0xff]
        %v317 = vld [vmem:[%s293 + $0x40] sm:$0xff]
        %v318 = vld [vmem:[%s293 + $0x48] sm:$0xff]
        %v319 = vld [vmem:[%s293 + $0x50] sm:$0xff]
        %v320 = vld [vmem:[%s293 + $0x58] sm:$0xff]
        %v321 = vld [vmem:[%s293 + $0x60] sm:$0xff]
        %v322 = vld [vmem:[%s293 + $0x68] sm:$0xff]
        %v323 = vld [vmem:[%s293 + $0x70] sm:$0xff]
        %v324 = vld [vmem:[%s293 + $0x78] sm:$0xff]
        %v325 = vld [vmem:[%s1] sm:$0xff]
        %v326 = vld [vmem:[%s1 + $0x8] sm:$0xff]
        %v327 = vld [vmem:[%s1 + $0x10] sm:$0xff]
        %v328 = vld [vmem:[%s1 + $0x18] sm:$0xff]
        %v329 = vld [vmem:[%s1 + $0x20] sm:$0xff]
        %v330 = vld [vmem:[%s1 + $0x28] sm:$0xff]
        %v331 = vld [vmem:[%s1 + $0x30] sm:$0xff]
        %v332 = vld [vmem:[%s1 + $0x38] sm:$0xff]
        %v333 = vld [vmem:[%s1 + $0x40] sm:$0xff]
        %v334 = vld [vmem:[%s1 + $0x48] sm:$0xff]
        %v335 = vld [vmem:[%s1 + $0x50] sm:$0xff]
        %v336 = vld [vmem:[%s1 + $0x58] sm:$0xff]
        %v337 = vld [vmem:[%s1 + $0x60] sm:$0xff]
        %v338 = vld [vmem:[%s1 + $0x68] sm:$0xff]
        %v339 = vld [vmem:[%s1 + $0x70] sm:$0xff]
        %v340 = vld [vmem:[%s1 + $0x78] sm:$0xff]
        %v341 = vld [vmem:[%s2] sm:$0xf]
        %v343 = vlaneseq
        %v344 = vshrl.u32 %v343, 7
        %v345 = vsub.s32 0, %v344
        %v346 = vrot.slane %v341, %v345
        %v347 = vlaneseq
        %v348 = vshrl.u32 %v347, 7
        %v349 = vsub.s32 1, %v348
        %v350 = vrot.slane %v341, %v349
        %v351 = vlaneseq
        %v352 = vshrl.u32 %v351, 7
        %v353 = vsub.s32 2, %v352
        %v354 = vrot.slane %v341, %v353
        %v355 = vlaneseq
        %v356 = vshrl.u32 %v355, 7
        %v357 = vsub.s32 3, %v356
        %v358 = vrot.slane %v341, %v357
        %vm363 = vcmask 261120
        %v365 = vsel %vm363, %v309, 0
        %v368 = vsel %vm363, %v310, 0
        %v371 = vsel %vm363, %v311, 0
        %v374 = vsel %vm363, %v312, 0
        %v377 = vsel %vm363, %v313, 0
        %v380 = vsel %vm363, %v314, 0
        %v383 = vsel %vm363, %v315, 0
        %v386 = vsel %vm363, %v316, 0
        %v389 = vsel %vm363, %v317, 0
        %v392 = vsel %vm363, %v318, 0
        %v395 = vsel %vm363, %v319, 0
        %v398 = vsel %vm363, %v320, 0
        %v401 = vsel %vm363, %v321, 0
        %v404 = vsel %vm363, %v322, 0
        %v407 = vsel %vm363, %v323, 0
        %v410 = vsel %vm363, %v324, 0
        %412 = vmatprep.subr.mxu0 %v326
        %413 = vmatpush1.msra.mxu0 %v325
        %414 = vmatprep.subr.mxu0 %v330
        %415 = vmatpush1.msra.mxu0 %v329
        %416 = vmatprep.subr.mxu0 %v334
        %417 = vmatpush1.msra.mxu0 %v333
        %418 = vmatprep.subr.mxu0 %v338
        %419 = vmatpush1.msra.mxu0 %v337
        %420 = vmatprep.subr.mxu0 0.0
        %421 = vmatpush1.msra.mxu0 0.0
        %422 = vmatprep.subr.mxu0 0.0
        %423 = vmatpush1.msra.mxu0 0.0
        %424 = vmatprep.subr.mxu0 0.0
        %425 = vmatpush1.msra.mxu0 0.0
        %426 = vmatprep.subr.mxu0 0.0
        %427 = vmatpush1.msra.mxu0 0.0
        %428 = vmatprep.subr.mxu0 0.0
        %429 = vmatpush1.msra.mxu0 0.0
        %430 = vmatprep.subr.mxu0 0.0
        %431 = vmatpush1.msra.mxu0 0.0
        %432 = vmatprep.subr.mxu0 0.0
        %433 = vmatpush1.msra.mxu0 0.0
        %434 = vmatprep.subr.mxu0 0.0
        %435 = vmatpush1.msra.mxu0 0.0
        %436 = vmatprep.subr.mxu0 0.0
        %437 = vmatpush1.msra.mxu0 0.0
        %438 = vmatprep.subr.mxu0 0.0
        %439 = vmatpush1.msra.mxu0 0.0
        %440 = vmatprep.subr.mxu0 0.0
        %441 = vmatpush1.msra.mxu0 0.0
        %442 = vmatprep.subr.mxu0 0.0
        %443 = vmatpush1.msra.mxu0 0.0
        %444 = vmatprep.subr.mxu0 0.0
        %445 = vmatpush1.msra.mxu0 0.0
        %446 = vmatprep.subr.mxu0 0.0
        %447 = vmatpush1.msra.mxu0 0.0
        %448 = vmatprep.subr.mxu0 0.0
        %449 = vmatpush1.msra.mxu0 0.0
        %450 = vmatprep.subr.mxu0 0.0
        %451 = vmatpush1.msra.mxu0 0.0
        %452 = vmatprep.subr.mxu0 0.0
        %453 = vmatpush1.msra.mxu0 0.0
        %454 = vmatprep.subr.mxu0 0.0
        %455 = vmatpush1.msra.mxu0 0.0
        %456 = vmatprep.subr.mxu0 0.0
        %457 = vmatpush1.msra.mxu0 0.0
        %458 = vmatprep.subr.mxu0 0.0
        %459 = vmatpush1.msra.mxu0 0.0
        %460 = vmatprep.subr.mxu0 0.0
        %461 = vmatpush1.msra.mxu0 0.0
        %462 = vmatprep.subr.mxu0 0.0
        %463 = vmatpush1.msra.mxu0 0.0
        %464 = vmatprep.subr.mxu0 0.0
        %465 = vmatpush1.msra.mxu0 0.0
        %466 = vmatprep.subr.mxu0 0.0
        %467 = vmatpush1.msra.mxu0 0.0
        %468 = vmatprep.subr.mxu0 0.0
        %469 = vmatpush1.msra.mxu0 0.0
        %470 = vmatprep.subr.mxu0 0.0
        %471 = vmatpush1.msra.mxu0 0.0
        %472 = vmatprep.subr.mxu0 0.0
        %473 = vmatpush1.msra.mxu0 0.0
        %474 = vmatprep.subr.mxu0 0.0
        %475 = vmatpush1.msra.mxu0 0.0
        %476 = vmatprep.mubr.f32.mxu0 0.0
        %477 = vmatmul.mubr.f32.gmra.mrb[0].mxu0 %v365
        %v478 = vpop.f32.mrb[0].mxu0
        %v479 = vadd.f32 %v346, %v478
        %v480 = vpop.f32.mrb[0].mxu0
        %v481 = vadd.f32 %v350, %v480
        %482 = vmatprep.mubr.f32.mxu0 0.0
        %483 = vmatmul.mubr.f32.gmra.mrb[0].mxu0 %v368
        %v484 = vpop.f32.mrb[0].mxu0
        %v485 = vadd.f32 %v346, %v484
        %v486 = vpop.f32.mrb[0].mxu0
        %v487 = vadd.f32 %v350, %v486
        %488 = vmatprep.mubr.f32.mxu0 0.0
        %489 = vmatmul.mubr.f32.gmra.mrb[0].mxu0 %v371
        %v490 = vpop.f32.mrb[0].mxu0
        %v491 = vadd.f32 %v346, %v490
        %v492 = vpop.f32.mrb[0].mxu0
        %v493 = vadd.f32 %v350, %v492
        %494 = vmatprep.mubr.f32.mxu0 0.0
        %495 = vmatmul.mubr.f32.gmra.mrb[0].mxu0 %v374
        %v496 = vpop.f32.mrb[0].mxu0
        %v497 = vadd.f32 %v346, %v496
        %v498 = vpop.f32.mrb[0].mxu0
        %v499 = vadd.f32 %v350, %v498
        %500 = vmatprep.mubr.f32.mxu0 0.0
        %501 = vmatmul.mubr.f32.gmra.mrb[0].mxu0 %v377
        %v502 = vpop.f32.mrb[0].mxu0
        %v503 = vadd.f32 %v346, %v502
        %v504 = vpop.f32.mrb[0].mxu0
        %v505 = vadd.f32 %v350, %v504
        %506 = vmatprep.mubr.f32.mxu0 0.0
        %507 = vmatmul.mubr.f32.gmra.mrb[0].mxu0 %v380
        %v508 = vpop.f32.mrb[0].mxu0
        %v509 = vadd.f32 %v346, %v508
        %v510 = vpop.f32.mrb[0].mxu0
        %v511 = vadd.f32 %v350, %v510
        %512 = vmatprep.mubr.f32.mxu0 0.0
        %513 = vmatmul.mubr.f32.gmra.mrb[0].mxu0 %v383
        %v514 = vpop.f32.mrb[0].mxu0
        %v515 = vadd.f32 %v346, %v514
        %v516 = vpop.f32.mrb[0].mxu0
        %v517 = vadd.f32 %v350, %v516
        %518 = vmatprep.mubr.f32.mxu0 0.0
        %519 = vmatmul.mubr.f32.gmra.mrb[0].mxu0 %v386
        %v520 = vpop.f32.mrb[0].mxu0
        %v521 = vadd.f32 %v346, %v520
        %v522 = vpop.f32.mrb[0].mxu0
        %v523 = vadd.f32 %v350, %v522
        %524 = vmatprep.mubr.f32.mxu0 0.0
        %525 = vmatmul.mubr.f32.gmra.mrb[0].mxu0 %v389
        %v526 = vpop.f32.mrb[0].mxu0
        %v527 = vadd.f32 %v346, %v526
        %v528 = vpop.f32.mrb[0].mxu0
        %v529 = vadd.f32 %v350, %v528
        %530 = vmatprep.mubr.f32.mxu0 0.0
        %531 = vmatmul.mubr.f32.gmra.mrb[0].mxu0 %v392
        %v532 = vpop.f32.mrb[0].mxu0
        %v533 = vadd.f32 %v346, %v532
        %v534 = vpop.f32.mrb[0].mxu0
        %v535 = vadd.f32 %v350, %v534
        %536 = vmatprep.mubr.f32.mxu0 0.0
        %537 = vmatmul.mubr.f32.gmra.mrb[0].mxu0 %v395
        %v538 = vpop.f32.mrb[0].mxu0
        %v539 = vadd.f32 %v346, %v538
        %v540 = vpop.f32.mrb[0].mxu0
        %v541 = vadd.f32 %v350, %v540
        %542 = vmatprep.mubr.f32.mxu0 0.0
        %543 = vmatmul.mubr.f32.gmra.mrb[0].mxu0 %v398
        %v544 = vpop.f32.mrb[0].mxu0
        %v545 = vadd.f32 %v346, %v544
        %v546 = vpop.f32.mrb[0].mxu0
        %v547 = vadd.f32 %v350, %v546
        %548 = vmatprep.mubr.f32.mxu0 0.0
        %549 = vmatmul.mubr.f32.gmra.mrb[0].mxu0 %v401
        %v550 = vpop.f32.mrb[0].mxu0
        %v551 = vadd.f32 %v346, %v550
        %v552 = vpop.f32.mrb[0].mxu0
        %v553 = vadd.f32 %v350, %v552
        %554 = vmatprep.mubr.f32.mxu0 0.0
        %555 = vmatmul.mubr.f32.gmra.mrb[0].mxu0 %v404
        %v556 = vpop.f32.mrb[0].mxu0
        %v557 = vadd.f32 %v346, %v556
        %v558 = vpop.f32.mrb[0].mxu0
        %v559 = vadd.f32 %v350, %v558
        %560 = vmatprep.mubr.f32.mxu0 0.0
        %561 = vmatmul.mubr.f32.gmra.mrb[0].mxu0 %v407
        %v562 = vpop.f32.mrb[0].mxu0
        %v563 = vadd.f32 %v346, %v562
        %v564 = vpop.f32.mrb[0].mxu0
        %v565 = vadd.f32 %v350, %v564
        %566 = vmatprep.mubr.f32.mxu0 0.0
        %567 = vmatmul.mubr.f32.gmra.mrb[0].mxu0 %v410
        %v568 = vpop.f32.mrb[0].mxu0
        %v569 = vadd.f32 %v346, %v568
        %v570 = vpop.f32.mrb[0].mxu0
        %v571 = vadd.f32 %v350, %v570
        %572 = vdwg.mxu0
        %573 = vmatprep.subr.mxu0 %v328
        %574 = vmatpush1.msra.mxu0 %v327
        %575 = vmatprep.subr.mxu0 %v332
        %576 = vmatpush1.msra.mxu0 %v331
        %577 = vmatprep.subr.mxu0 %v336
        %578 = vmatpush1.msra.mxu0 %v335
        %579 = vmatprep.subr.mxu0 %v340
        %580 = vmatpush1.msra.mxu0 %v339
        %581 = vmatprep.subr.mxu0 0.0
        %582 = vmatpush1.msra.mxu0 0.0
        %583 = vmatprep.subr.mxu0 0.0
        %584 = vmatpush1.msra.mxu0 0.0
        %585 = vmatprep.subr.mxu0 0.0
        %586 = vmatpush1.msra.mxu0 0.0
        %587 = vmatprep.subr.mxu0 0.0
        %588 = vmatpush1.msra.mxu0 0.0
        %589 = vmatprep.subr.mxu0 0.0
        %590 = vmatpush1.msra.mxu0 0.0
        %591 = vmatprep.subr.mxu0 0.0
        %592 = vmatpush1.msra.mxu0 0.0
        %593 = vmatprep.subr.mxu0 0.0
        %594 = vmatpush1.msra.mxu0 0.0
        %595 = vmatprep.subr.mxu0 0.0
        %596 = vmatpush1.msra.mxu0 0.0
        %597 = vmatprep.subr.mxu0 0.0
        %598 = vmatpush1.msra.mxu0 0.0
        %599 = vmatprep.subr.mxu0 0.0
        %600 = vmatpush1.msra.mxu0 0.0
        %601 = vmatprep.subr.mxu0 0.0
        %602 = vmatpush1.msra.mxu0 0.0
        %603 = vmatprep.subr.mxu0 0.0
        %604 = vmatpush1.msra.mxu0 0.0
        %605 = vmatprep.subr.mxu0 0.0
        %606 = vmatpush1.msra.mxu0 0.0
        %607 = vmatprep.subr.mxu0 0.0
        %608 = vmatpush1.msra.mxu0 0.0
        %609 = vmatprep.subr.mxu0 0.0
        %610 = vmatpush1.msra.mxu0 0.0
        %611 = vmatprep.subr.mxu0 0.0
        %612 = vmatpush1.msra.mxu0 0.0
        %613 = vmatprep.subr.mxu0 0.0
        %614 = vmatpush1.msra.mxu0 0.0
        %615 = vmatprep.subr.mxu0 0.0
        %616 = vmatpush1.msra.mxu0 0.0
        %617 = vmatprep.subr.mxu0 0.0
        %618 = vmatpush1.msra.mxu0 0.0
        %619 = vmatprep.subr.mxu0 0.0
        %620 = vmatpush1.msra.mxu0 0.0
        %621 = vmatprep.subr.mxu0 0.0
        %622 = vmatpush1.msra.mxu0 0.0
        %623 = vmatprep.subr.mxu0 0.0
        %624 = vmatpush1.msra.mxu0 0.0
        %625 = vmatprep.subr.mxu0 0.0
        %626 = vmatpush1.msra.mxu0 0.0
        %627 = vmatprep.subr.mxu0 0.0
        %628 = vmatpush1.msra.mxu0 0.0
        %629 = vmatprep.subr.mxu0 0.0
        %630 = vmatpush1.msra.mxu0 0.0
        %631 = vmatprep.subr.mxu0 0.0
        %632 = vmatpush1.msra.mxu0 0.0
        %633 = vmatprep.subr.mxu0 0.0
        %634 = vmatpush1.msra.mxu0 0.0
        %635 = vmatprep.subr.mxu0 0.0
        %636 = vmatpush1.msra.mxu0 0.0
        %637 = vmatprep.mubr.f32.mxu0 0.0
        %638 = vmatmul.mubr.f32.gmra.mrb[0].mxu0 %v365
        %v639 = vpop.f32.mrb[0].mxu0
        %v640 = vadd.f32 %v354, %v639
        %v641 = vpop.f32.mrb[0].mxu0
        %v642 = vadd.f32 %v358, %v641
        %643 = vmatprep.mubr.f32.mxu0 0.0
        %644 = vmatmul.mubr.f32.gmra.mrb[0].mxu0 %v368
        %v645 = vpop.f32.mrb[0].mxu0
        %v646 = vadd.f32 %v354, %v645
        %v647 = vpop.f32.mrb[0].mxu0
        %v648 = vadd.f32 %v358, %v647
        %649 = vmatprep.mubr.f32.mxu0 0.0
        %650 = vmatmul.mubr.f32.gmra.mrb[0].mxu0 %v371
        %v651 = vpop.f32.mrb[0].mxu0
        %v652 = vadd.f32 %v354, %v651
        %v653 = vpop.f32.mrb[0].mxu0
        %v654 = vadd.f32 %v358, %v653
        %655 = vmatprep.mubr.f32.mxu0 0.0
        %656 = vmatmul.mubr.f32.gmra.mrb[0].mxu0 %v374
        %v657 = vpop.f32.mrb[0].mxu0
        %v658 = vadd.f32 %v354, %v657
        %v659 = vpop.f32.mrb[0].mxu0
        %v660 = vadd.f32 %v358, %v659
        %661 = vmatprep.mubr.f32.mxu0 0.0
        %662 = vmatmul.mubr.f32.gmra.mrb[0].mxu0 %v377
        %v663 = vpop.f32.mrb[0].mxu0
        %v664 = vadd.f32 %v354, %v663
        %v665 = vpop.f32.mrb[0].mxu0
        %v666 = vadd.f32 %v358, %v665
        %667 = vmatprep.mubr.f32.mxu0 0.0
        %668 = vmatmul.mubr.f32.gmra.mrb[0].mxu0 %v380
        %v669 = vpop.f32.mrb[0].mxu0
        %v670 = vadd.f32 %v354, %v669
        %v671 = vpop.f32.mrb[0].mxu0
        %v672 = vadd.f32 %v358, %v671
        %673 = vmatprep.mubr.f32.mxu0 0.0
        %674 = vmatmul.mubr.f32.gmra.mrb[0].mxu0 %v383
        %v675 = vpop.f32.mrb[0].mxu0
        %v676 = vadd.f32 %v354, %v675
        %v677 = vpop.f32.mrb[0].mxu0
        %v678 = vadd.f32 %v358, %v677
        %679 = vmatprep.mubr.f32.mxu0 0.0
        %680 = vmatmul.mubr.f32.gmra.mrb[0].mxu0 %v386
        %v681 = vpop.f32.mrb[0].mxu0
        %v682 = vadd.f32 %v354, %v681
        %v683 = vpop.f32.mrb[0].mxu0
        %v684 = vadd.f32 %v358, %v683
        %685 = vmatprep.mubr.f32.mxu0 0.0
        %686 = vmatmul.mubr.f32.gmra.mrb[0].mxu0 %v389
        %v687 = vpop.f32.mrb[0].mxu0
        %v688 = vadd.f32 %v354, %v687
        %v689 = vpop.f32.mrb[0].mxu0
        %v690 = vadd.f32 %v358, %v689
        %691 = vmatprep.mubr.f32.mxu0 0.0
        %692 = vmatmul.mubr.f32.gmra.mrb[0].mxu0 %v392
        %v693 = vpop.f32.mrb[0].mxu0
        %v694 = vadd.f32 %v354, %v693
        %v695 = vpop.f32.mrb[0].mxu0
        %v696 = vadd.f32 %v358, %v695
        %697 = vmatprep.mubr.f32.mxu0 0.0
        %698 = vmatmul.mubr.f32.gmra.mrb[0].mxu0 %v395
        %v699 = vpop.f32.mrb[0].mxu0
        %v700 = vadd.f32 %v354, %v699
        %v701 = vpop.f32.mrb[0].mxu0
        %v702 = vadd.f32 %v358, %v701
        %703 = vmatprep.mubr.f32.mxu0 0.0
        %704 = vmatmul.mubr.f32.gmra.mrb[0].mxu0 %v398
        %v705 = vpop.f32.mrb[0].mxu0
        %v706 = vadd.f32 %v354, %v705
        %v707 = vpop.f32.mrb[0].mxu0
        %v708 = vadd.f32 %v358, %v707
        %709 = vmatprep.mubr.f32.mxu0 0.0
        %710 = vmatmul.mubr.f32.gmra.mrb[0].mxu0 %v401
        %v711 = vpop.f32.mrb[0].mxu0
        %v712 = vadd.f32 %v354, %v711
        %v713 = vpop.f32.mrb[0].mxu0
        %v714 = vadd.f32 %v358, %v713
        %715 = vmatprep.mubr.f32.mxu0 0.0
        %716 = vmatmul.mubr.f32.gmra.mrb[0].mxu0 %v404
        %v717 = vpop.f32.mrb[0].mxu0
        %v718 = vadd.f32 %v354, %v717
        %v719 = vpop.f32.mrb[0].mxu0
        %v720 = vadd.f32 %v358, %v719
        %721 = vmatprep.mubr.f32.mxu0 0.0
        %722 = vmatmul.mubr.f32.gmra.mrb[0].mxu0 %v407
        %v723 = vpop.f32.mrb[0].mxu0
        %v724 = vadd.f32 %v354, %v723
        %v725 = vpop.f32.mrb[0].mxu0
        %v726 = vadd.f32 %v358, %v725
        %727 = vmatprep.mubr.f32.mxu0 0.0
        %728 = vmatmul.mubr.f32.gmra.mrb[0].mxu0 %v410
        %v729 = vpop.f32.mrb[0].mxu0
        %v730 = vadd.f32 %v354, %v729
        %v731 = vpop.f32.mrb[0].mxu0
        %v732 = vadd.f32 %v358, %v731
        %733 = vdwg.mxu0
        %v734 = vtanh.pop %v479
        %v735 = vtanh.pop %v481
        %v736 = vtanh.pop %v485
        %v737 = vtanh.pop %v487
        %v738 = vtanh.pop %v491
        %v739 = vtanh.pop %v493
        %v740 = vtanh.pop %v497
        %v741 = vtanh.pop %v499
        %v742 = vtanh.pop %v503
        %v743 = vtanh.pop %v505
        %v744 = vtanh.pop %v509
        %v745 = vtanh.pop %v511
        %v746 = vtanh.pop %v515
        %v747 = vtanh.pop %v517
        %v748 = vtanh.pop %v521
        %v749 = vtanh.pop %v523
        %v750 = vtanh.pop %v527
        %v751 = vtanh.pop %v529
        %v752 = vtanh.pop %v533
        %v753 = vtanh.pop %v535
        %v754 = vtanh.pop %v539
        %v755 = vtanh.pop %v541
        %v756 = vtanh.pop %v545
        %v757 = vtanh.pop %v547
        %v758 = vtanh.pop %v551
        %v759 = vtanh.pop %v553
        %v760 = vtanh.pop %v557
        %v761 = vtanh.pop %v559
        %v762 = vtanh.pop %v563
        %v763 = vtanh.pop %v565
        %v764 = vtanh.pop %v569
        %v765 = vtanh.pop %v571
        %v766 = vxor.u32 %v640, 2147483648
        %v767 = vxor.u32 %v642, 2147483648
        %v768 = vxor.u32 %v646, 2147483648
        %v769 = vxor.u32 %v648, 2147483648
        %v770 = vxor.u32 %v652, 2147483648
        %v771 = vxor.u32 %v654, 2147483648
        %v772 = vxor.u32 %v658, 2147483648
        %v773 = vxor.u32 %v660, 2147483648
        %v774 = vxor.u32 %v664, 2147483648
        %v775 = vxor.u32 %v666, 2147483648
        %v776 = vxor.u32 %v670, 2147483648
        %v777 = vxor.u32 %v672, 2147483648
        %v778 = vxor.u32 %v676, 2147483648
        %v779 = vxor.u32 %v678, 2147483648
        %v780 = vxor.u32 %v682, 2147483648
        %v781 = vxor.u32 %v684, 2147483648
        %v782 = vxor.u32 %v688, 2147483648
        %v783 = vxor.u32 %v690, 2147483648
        %v784 = vxor.u32 %v694, 2147483648
        %v785 = vxor.u32 %v696, 2147483648
        %v786 = vxor.u32 %v700, 2147483648
        %v787 = vxor.u32 %v702, 2147483648
        %v788 = vxor.u32 %v706, 2147483648
        %v789 = vxor.u32 %v708, 2147483648
        %v790 = vxor.u32 %v712, 2147483648
        %v791 = vxor.u32 %v714, 2147483648
        %v792 = vxor.u32 %v718, 2147483648
        %v793 = vxor.u32 %v720, 2147483648
        %v794 = vxor.u32 %v724, 2147483648
        %v795 = vxor.u32 %v726, 2147483648
        %v796 = vxor.u32 %v730, 2147483648
        %v797 = vxor.u32 %v732, 2147483648
        %v798 = vmul.f32 %v766, 1.442695
        %v799 = vpow.pop %v798
        %v800 = vmul.f32 %v767, 1.442695
        %v801 = vpow.pop %v800
        %v802 = vmul.f32 %v768, 1.442695
        %v803 = vpow.pop %v802
        %v804 = vmul.f32 %v769, 1.442695
        %v805 = vpow.pop %v804
        %v806 = vmul.f32 %v770, 1.442695
        %v807 = vpow.pop %v806
        %v808 = vmul.f32 %v771, 1.442695
        %v809 = vpow.pop %v808
        %v810 = vmul.f32 %v772, 1.442695
        %v811 = vpow.pop %v810
        %v812 = vmul.f32 %v773, 1.442695
        %v813 = vpow.pop %v812
        %v814 = vmul.f32 %v774, 1.442695
        %v815 = vpow.pop %v814
        %v816 = vmul.f32 %v775, 1.442695
        %v817 = vpow.pop %v816
        %v818 = vmul.f32 %v776, 1.442695
        %v819 = vpow.pop %v818
        %v820 = vmul.f32 %v777, 1.442695
        %v821 = vpow.pop %v820
        %v822 = vmul.f32 %v778, 1.442695
        %v823 = vpow.pop %v822
        %v824 = vmul.f32 %v779, 1.442695
        %v825 = vpow.pop %v824
        %v826 = vmul.f32 %v780, 1.442695
        %v827 = vpow.pop %v826
        %v828 = vmul.f32 %v781, 1.442695
        %v829 = vpow.pop %v828
        %v830 = vmul.f32 %v782, 1.442695
        %v831 = vpow.pop %v830
        %v832 = vmul.f32 %v783, 1.442695
        %v833 = vpow.pop %v832
        %v834 = vmul.f32 %v784, 1.442695
        %v835 = vpow.pop %v834
        %v836 = vmul.f32 %v785, 1.442695
        %v837 = vpow.pop %v836
        %v838 = vmul.f32 %v786, 1.442695
        %v839 = vpow.pop %v838
        %v840 = vmul.f32 %v787, 1.442695
        %v841 = vpow.pop %v840
        %v842 = vmul.f32 %v788, 1.442695
        %v843 = vpow.pop %v842
        %v844 = vmul.f32 %v789, 1.442695
        %v845 = vpow.pop %v844
        %v846 = vmul.f32 %v790, 1.442695
        %v847 = vpow.pop %v846
        %v848 = vmul.f32 %v791, 1.442695
        %v849 = vpow.pop %v848
        %v850 = vmul.f32 %v792, 1.442695
        %v851 = vpow.pop %v850
        %v852 = vmul.f32 %v793, 1.442695
        %v853 = vpow.pop %v852
        %v854 = vmul.f32 %v794, 1.442695
        %v855 = vpow.pop %v854
        %v856 = vmul.f32 %v795, 1.442695
        %v857 = vpow.pop %v856
        %v858 = vmul.f32 %v796, 1.442695
        %v859 = vpow.pop %v858
        %v860 = vmul.f32 %v797, 1.442695
        %v861 = vpow.pop %v860
        %v862 = vadd.f32 %v799, 1.0
        %v863 = vadd.f32 %v801, 1.0
        %v864 = vadd.f32 %v803, 1.0
        %v865 = vadd.f32 %v805, 1.0
        %v866 = vadd.f32 %v807, 1.0
        %v867 = vadd.f32 %v809, 1.0
        %v868 = vadd.f32 %v811, 1.0
        %v869 = vadd.f32 %v813, 1.0
        %v870 = vadd.f32 %v815, 1.0
        %v871 = vadd.f32 %v817, 1.0
        %v872 = vadd.f32 %v819, 1.0
        %v873 = vadd.f32 %v821, 1.0
        %v874 = vadd.f32 %v823, 1.0
        %v875 = vadd.f32 %v825, 1.0
        %v876 = vadd.f32 %v827, 1.0
        %v877 = vadd.f32 %v829, 1.0
        %v878 = vadd.f32 %v831, 1.0
        %v879 = vadd.f32 %v833, 1.0
        %v880 = vadd.f32 %v835, 1.0
        %v881 = vadd.f32 %v837, 1.0
        %v882 = vadd.f32 %v839, 1.0
        %v883 = vadd.f32 %v841, 1.0
        %v884 = vadd.f32 %v843, 1.0
        %v885 = vadd.f32 %v845, 1.0
        %v886 = vadd.f32 %v847, 1.0
        %v887 = vadd.f32 %v849, 1.0
        %v888 = vadd.f32 %v851, 1.0
        %v889 = vadd.f32 %v853, 1.0
        %v890 = vadd.f32 %v855, 1.0
        %v891 = vadd.f32 %v857, 1.0
        %v892 = vadd.f32 %v859, 1.0
        %v893 = vadd.f32 %v861, 1.0
        %v894 = vrcp.pop %v862
        %v895 = vmul.f32 1.0, %v894
        %v896 = vrcp.pop %v863
        %v897 = vmul.f32 1.0, %v896
        %v898 = vrcp.pop %v864
        %v899 = vmul.f32 1.0, %v898
        %v900 = vrcp.pop %v865
        %v901 = vmul.f32 1.0, %v900
        %v902 = vrcp.pop %v866
        %v903 = vmul.f32 1.0, %v902
        %v904 = vrcp.pop %v867
        %v905 = vmul.f32 1.0, %v904
        %v906 = vrcp.pop %v868
        %v907 = vmul.f32 1.0, %v906
        %v908 = vrcp.pop %v869
        %v909 = vmul.f32 1.0, %v908
        %v910 = vrcp.pop %v870
        %v911 = vmul.f32 1.0, %v910
        %v912 = vrcp.pop %v871
        %v913 = vmul.f32 1.0, %v912
        %v914 = vrcp.pop %v872
        %v915 = vmul.f32 1.0, %v914
        %v916 = vrcp.pop %v873
        %v917 = vmul.f32 1.0, %v916
        %v918 = vrcp.pop %v874
        %v919 = vmul.f32 1.0, %v918
        %v920 = vrcp.pop %v875
        %v921 = vmul.f32 1.0, %v920
        %v922 = vrcp.pop %v876
        %v923 = vmul.f32 1.0, %v922
        %v924 = vrcp.pop %v877
        %v925 = vmul.f32 1.0, %v924
        %v926 = vrcp.pop %v878
        %v927 = vmul.f32 1.0, %v926
        %v928 = vrcp.pop %v879
        %v929 = vmul.f32 1.0, %v928
        %v930 = vrcp.pop %v880
        %v931 = vmul.f32 1.0, %v930
        %v932 = vrcp.pop %v881
        %v933 = vmul.f32 1.0, %v932
        %v934 = vrcp.pop %v882
        %v935 = vmul.f32 1.0, %v934
        %v936 = vrcp.pop %v883
        %v937 = vmul.f32 1.0, %v936
        %v938 = vrcp.pop %v884
        %v939 = vmul.f32 1.0, %v938
        %v940 = vrcp.pop %v885
        %v941 = vmul.f32 1.0, %v940
        %v942 = vrcp.pop %v886
        %v943 = vmul.f32 1.0, %v942
        %v944 = vrcp.pop %v887
        %v945 = vmul.f32 1.0, %v944
        %v946 = vrcp.pop %v888
        %v947 = vmul.f32 1.0, %v946
        %v948 = vrcp.pop %v889
        %v949 = vmul.f32 1.0, %v948
        %v950 = vrcp.pop %v890
        %v951 = vmul.f32 1.0, %v950
        %v952 = vrcp.pop %v891
        %v953 = vmul.f32 1.0, %v952
        %v954 = vrcp.pop %v892
        %v955 = vmul.f32 1.0, %v954
        %v956 = vrcp.pop %v893
        %v957 = vmul.f32 1.0, %v956
        %v958 = vmul.f32 %v734, %v895
        %v959 = vmul.f32 %v735, %v897
        %v960 = vmul.f32 %v736, %v899
        %v961 = vmul.f32 %v737, %v901
        %v962 = vmul.f32 %v738, %v903
        %v963 = vmul.f32 %v739, %v905
        %v964 = vmul.f32 %v740, %v907
        %v965 = vmul.f32 %v741, %v909
        %v966 = vmul.f32 %v742, %v911
        %v967 = vmul.f32 %v743, %v913
        %v968 = vmul.f32 %v744, %v915
        %v969 = vmul.f32 %v745, %v917
        %v970 = vmul.f32 %v746, %v919
        %v971 = vmul.f32 %v747, %v921
        %v972 = vmul.f32 %v748, %v923
        %v973 = vmul.f32 %v749, %v925
        %v974 = vmul.f32 %v750, %v927
        %v975 = vmul.f32 %v751, %v929
        %v976 = vmul.f32 %v752, %v931
        %v977 = vmul.f32 %v753, %v933
        %v978 = vmul.f32 %v754, %v935
        %v979 = vmul.f32 %v755, %v937
        %v980 = vmul.f32 %v756, %v939
        %v981 = vmul.f32 %v757, %v941
        %v982 = vmul.f32 %v758, %v943
        %v983 = vmul.f32 %v759, %v945
        %v984 = vmul.f32 %v760, %v947
        %v985 = vmul.f32 %v761, %v949
        %v986 = vmul.f32 %v762, %v951
        %v987 = vmul.f32 %v763, %v953
        %v988 = vmul.f32 %v764, %v955
        %v989 = vmul.f32 %v765, %v957
        %v990 = vld [vmem:[%s3] sm:$0x3]
        %v991 = vld [vmem:[#allocation5] sm:$0x1]
        %993 = vset.pattern.permute.xlu0 0
        %994 = vperm.xlu0 %993, %v991
        %v995 = vpop.permute.xlu0 %994
        %v997 = vlaneseq
        %v998 = vshrl.u32 %v997, 7
        %v999 = vsub.s32 0, %v998
        %v1000 = vrot.slane %v995, %v999
        %v1002 = vlaneseq
        %v1003 = vshrl.u32 %v1002, 7
        %v1004 = vsub.s32 0, %v1003
        %v1005 = vrot.slane %v990, %v1004
        %v1006 = vlaneseq
        %v1007 = vshrl.u32 %v1006, 7
        %v1008 = vsub.s32 1, %v1007
        %v1009 = vrot.slane %v990, %v1008
        %1012 = vmatprep.subr.mxu0 %v959
        %1013 = vmatpush1.xpose.msra.mxu0 %v958
        %1014 = vmatprep.subr.mxu0 %v961
        %1015 = vmatpush1.xpose.msra.mxu0 %v960
        %1016 = vmatprep.subr.mxu0 %v963
        %1017 = vmatpush1.xpose.msra.mxu0 %v962
        %1018 = vmatprep.subr.mxu0 %v965
        %1019 = vmatpush1.xpose.msra.mxu0 %v964
        %1020 = vmatprep.subr.mxu0 %v967
        %1021 = vmatpush1.xpose.msra.mxu0 %v966
        %1022 = vmatprep.subr.mxu0 %v969
        %1023 = vmatpush1.xpose.msra.mxu0 %v968
        %1024 = vmatprep.subr.mxu0 %v971
        %1025 = vmatpush1.xpose.msra.mxu0 %v970
        %1026 = vmatprep.subr.mxu0 %v973
        %1027 = vmatpush1.xpose.msra.mxu0 %v972
        %1028 = vmatprep.subr.mxu0 %v975
        %1029 = vmatpush1.xpose.msra.mxu0 %v974
        %1030 = vmatprep.subr.mxu0 %v977
        %1031 = vmatpush1.xpose.msra.mxu0 %v976
        %1032 = vmatprep.subr.mxu0 %v979
        %1033 = vmatpush1.xpose.msra.mxu0 %v978
        %1034 = vmatprep.subr.mxu0 %v981
        %1035 = vmatpush1.xpose.msra.mxu0 %v980
        %1036 = vmatprep.subr.mxu0 %v983
        %1037 = vmatpush1.xpose.msra.mxu0 %v982
        %1038 = vmatprep.subr.mxu0 %v985
        %1039 = vmatpush1.xpose.msra.mxu0 %v984
        %1040 = vmatprep.subr.mxu0 %v987
        %1041 = vmatpush1.xpose.msra.mxu0 %v986
        %1042 = vmatprep.subr.mxu0 %v989
        %1043 = vmatpush1.xpose.msra.mxu0 %v988
        %1044 = vmatprep.subr.mxu0 0.0
        %1045 = vmatpush1.xpose.msra.mxu0 0.0
        %1046 = vmatprep.subr.mxu0 0.0
        %1047 = vmatpush1.xpose.msra.mxu0 0.0
        %1048 = vmatprep.subr.mxu0 0.0
        %1049 = vmatpush1.xpose.msra.mxu0 0.0
        %1050 = vmatprep.subr.mxu0 0.0
        %1051 = vmatpush1.xpose.msra.mxu0 0.0
        %1052 = vmatprep.subr.mxu0 0.0
        %1053 = vmatpush1.xpose.msra.mxu0 0.0
        %1054 = vmatprep.subr.mxu0 0.0
        %1055 = vmatpush1.xpose.msra.mxu0 0.0
        %1056 = vmatprep.subr.mxu0 0.0
        %1057 = vmatpush1.xpose.msra.mxu0 0.0
        %1058 = vmatprep.subr.mxu0 0.0
        %1059 = vmatpush1.xpose.msra.mxu0 0.0
        %1060 = vmatprep.subr.mxu0 0.0
        %1061 = vmatpush1.xpose.msra.mxu0 0.0
        %1062 = vmatprep.subr.mxu0 0.0
        %1063 = vmatpush1.xpose.msra.mxu0 0.0
        %1064 = vmatprep.subr.mxu0 0.0
        %1065 = vmatpush1.xpose.msra.mxu0 0.0
        %1066 = vmatprep.subr.mxu0 0.0
        %1067 = vmatpush1.xpose.msra.mxu0 0.0
        %1068 = vmatprep.subr.mxu0 0.0
        %1069 = vmatpush1.xpose.msra.mxu0 0.0
        %1070 = vmatprep.subr.mxu0 0.0
        %1071 = vmatpush1.xpose.msra.mxu0 0.0
        %1072 = vmatprep.subr.mxu0 0.0
        %1073 = vmatpush1.xpose.msra.mxu0 0.0
        %1074 = vmatprep.subr.mxu0 0.0
        %1075 = vmatpush1.xpose.msra.mxu0 0.0
        %1076 = vmatprep.mubr.f32.mxu0 %v1009
        %1077 = vmatmul.mubr.f32.gmra.mrb[0].mxu0 %v1005
        %v1078 = vpop.f32.mrb[0].mxu0
        %v1079 = vadd.f32 %v1000, %v1078
        %v1080 = vpop.f32.mrb[0].mxu0
        %1081 = vdwg.mxu0
        %s1082 = smul.u32 %s25, 128
        %v1083 = vlaneseq
        %v1084 = vand.u32 %v1083, 127
        %v1085 = vstv %s1082
        %v1086 = vadd.s32 %v1085, %v1084
        %vm1087 = vcmp.lt.s32.totalorder %v1086, 300
        %v1088 = vsel %vm1087, %v1079, -inf
        %v1089 = vld [vmem:[#allocation2] sm:$0x1]
        %vm1090 = vcmask 1040384
        %v1091 = vsel %vm1090, %v1088, -inf
        %1092 = vmax.xlane.f32.xlu0 %v1091
        %v1093 = vpop.xlane.xlu0 %1092
        %v1094 = vmax.f32 %v1089, %v1093
        %v1095 = vsub.f32 %v1089, %v1094
        %v1096 = vmul.f32 %v1095, 1.442695
        %v1097 = vpow.pop %v1096
        %1099 = vset.pattern.permute.xlu0 0
        %1100 = vperm.xlu0 %1099, %v1094
        %v1101 = vpop.permute.xlu0 %1100
        %v1103 = vlaneseq
        %v1104 = vshrl.u32 %v1103, 7
        %v1105 = vsub.s32 0, %v1104
        %v1106 = vrot.slane %v1101, %v1105
        %v1107 = vsub.f32 %v1088, %v1106
        %v1108 = vmul.f32 %v1107, 1.442695
        %v1109 = vpow.pop %v1108
        %v1110 = vld [vmem:[#allocation3] sm:$0x1]
        %v1111 = vmul.f32 %v1097, %v1110
        %v1112 = vsel %vm1090, %v1109, 0.0
        %1113 = vadd.xlane.f32.xlu0 %v1112
        %v1114 = vpop.xlane.xlu0 %1113
        %v1115 = vadd.f32 %v1111, %v1114
        %vm1116 = vcmask 0
        %1117 = vst.msk [vmem:[#allocation3] sm:$0x1] %vm1116, %v1115
        %v1118 = vld [vmem:[#allocation4] sm:$0x1]
        %v1119 = vmul.f32 %v1097, %v1118
        %v1120 = vld [vmem:[%s299] sm:$0xff]
        %v1121 = vld [vmem:[%s299 + $0x8] sm:$0xff]
        %v1122 = vld [vmem:[%s299 + $0x10] sm:$0xff]
        %v1123 = vld [vmem:[%s299 + $0x18] sm:$0xff]
        %v1124 = vld [vmem:[%s299 + $0x20] sm:$0xff]
        %v1125 = vld [vmem:[%s299 + $0x28] sm:$0xff]
        %v1126 = vld [vmem:[%s299 + $0x30] sm:$0xff]
        %v1127 = vld [vmem:[%s299 + $0x38] sm:$0xff]
        %v1128 = vld [vmem:[%s299 + $0x40] sm:$0xff]
        %v1129 = vld [vmem:[%s299 + $0x48] sm:$0xff]
        %v1130 = vld [vmem:[%s299 + $0x50] sm:$0xff]
        %v1131 = vld [vmem:[%s299 + $0x58] sm:$0xff]
        %v1132 = vld [vmem:[%s299 + $0x60] sm:$0xff]
        %v1133 = vld [vmem:[%s299 + $0x68] sm:$0xff]
        %v1134 = vld [vmem:[%s299 + $0x70] sm:$0xff]
        %v1135 = vld [vmem:[%s299 + $0x78] sm:$0xff]
        %1136 = vmatprep.subr.mxu0 0.0
        %1137 = vmatpush1.msra.mxu0 %v1120
        %1138 = vmatprep.subr.mxu0 0.0
        %1139 = vmatpush1.msra.mxu0 %v1121
        %1140 = vmatprep.subr.mxu0 0.0
        %1141 = vmatpush1.msra.mxu0 %v1122
        %1142 = vmatprep.subr.mxu0 0.0
        %1143 = vmatpush1.msra.mxu0 %v1123
        %1144 = vmatprep.subr.mxu0 0.0
        %1145 = vmatpush1.msra.mxu0 %v1124
        %1146 = vmatprep.subr.mxu0 0.0
        %1147 = vmatpush1.msra.mxu0 %v1125
        %1148 = vmatprep.subr.mxu0 0.0
        %1149 = vmatpush1.msra.mxu0 %v1126
        %1150 = vmatprep.subr.mxu0 0.0
        %1151 = vmatpush1.msra.mxu0 %v1127
        %1152 = vmatprep.subr.mxu0 0.0
        %1153 = vmatpush1.msra.mxu0 %v1128
        %1154 = vmatprep.subr.mxu0 0.0
        %1155 = vmatpush1.msra.mxu0 %v1129
        %1156 = vmatprep.subr.mxu0 0.0
        %1157 = vmatpush1.msra.mxu0 %v1130
        %1158 = vmatprep.subr.mxu0 0.0
        %1159 = vmatpush1.msra.mxu0 %v1131
        %1160 = vmatprep.subr.mxu0 0.0
        %1161 = vmatpush1.msra.mxu0 %v1132
        %1162 = vmatprep.subr.mxu0 0.0
        %1163 = vmatpush1.msra.mxu0 %v1133
        %1164 = vmatprep.subr.mxu0 0.0
        %1165 = vmatpush1.msra.mxu0 %v1134
        %1166 = vmatprep.subr.mxu0 0.0
        %1167 = vmatpush1.msra.mxu0 %v1135
        %1168 = vmatprep.subr.mxu0 0.0
        %1169 = vmatpush1.msra.mxu0 0.0
        %1170 = vmatprep.subr.mxu0 0.0
        %1171 = vmatpush1.msra.mxu0 0.0
        %1172 = vmatprep.subr.mxu0 0.0
        %1173 = vmatpush1.msra.mxu0 0.0
        %1174 = vmatprep.subr.mxu0 0.0
        %1175 = vmatpush1.msra.mxu0 0.0
        %1176 = vmatprep.subr.mxu0 0.0
        %1177 = vmatpush1.msra.mxu0 0.0
        %1178 = vmatprep.subr.mxu0 0.0
        %1179 = vmatpush1.msra.mxu0 0.0
        %1180 = vmatprep.subr.mxu0 0.0
        %1181 = vmatpush1.msra.mxu0 0.0
        %1182 = vmatprep.subr.mxu0 0.0
        %1183 = vmatpush1.msra.mxu0 0.0
        %1184 = vmatprep.subr.mxu0 0.0
        %1185 = vmatpush1.msra.mxu0 0.0
        %1186 = vmatprep.subr.mxu0 0.0
        %1187 = vmatpush1.msra.mxu0 0.0
        %1188 = vmatprep.subr.mxu0 0.0
        %1189 = vmatpush1.msra.mxu0 0.0
        %1190 = vmatprep.subr.mxu0 0.0
        %1191 = vmatpush1.msra.mxu0 0.0
        %1192 = vmatprep.subr.mxu0 0.0
        %1193 = vmatpush1.msra.mxu0 0.0
        %1194 = vmatprep.subr.mxu0 0.0
        %1195 = vmatpush1.msra.mxu0 0.0
        %1196 = vmatprep.subr.mxu0 0.0
        %1197 = vmatpush1.msra.mxu0 0.0
        %1198 = vmatprep.subr.mxu0 0.0
        %1199 = vmatpush1.msra.mxu0 0.0
        %1200 = vmatprep.mubr.f32.mxu0 0.0
        %1201 = vmatmul.mubr.f32.gmra.mrb[0].mxu0 %v1109
        %v1202 = vpop.f32.mrb[0].mxu0
        %v1203 = vadd.f32 0.0, %v1202
        %v1204 = vpop.f32.mrb[0].mxu0
        %1205 = vdwg.mxu0
        %v1206 = vadd.f32 %v1119, %v1203
        %1207 = vst.msk [vmem:[#allocation4] sm:$0x1] %vm1116, %v1206
        %1208 = vst.msk [vmem:[#allocation2] sm:$0x1] %vm1116, %v1094
        %v1209 = vxor.u32 %v1079, 2147483648
        %v1210 = vmul.f32 %v1209, 1.442695
        %v1211 = vpow.pop %v1210
        %v1212 = vadd.f32 %v1211, 1.0
        %v1213 = vrcp.pop %v1212
        %v1214 = vmul.f32 1.0, %v1213
        %1215 = vst [vmem:[%s288] sm:$0x1] %v1214
        %p1216 = scmp.eq.s32.totalorder %s25, 2
        // Predicated region
        $region49: #{tpu_custom_call.1} parent=43 // pred_check
          %p1217 = pneg %p1216
        $region50: #{tpu_custom_call.1} parent=43 // pred_check_branch
          %1219 = sbr.rel (%p1217) target = $region52
        $region51: #{tpu_custom_call.1} parent=43 // pred_region
          %v1220 = vld [vmem:[#allocation4] sm:$0x1]
          %v1221 = vld [vmem:[#allocation3] sm:$0x1]
          %v1222 = vrcp.pop %v1221
          %v1223 = vmul.f32 %v1220, %v1222
          %1224 = vst.msk [vmem:[#allocation6] sm:$0x1] %vm1116, %v1223
        $region52: #{tpu_custom_call.1} parent=43 // pred_fallthru
          _
        %s1225 = sand.u32 %s190, 1
        %s1226 = scalar_lea.sflag [#allocation9], %s1225
        %s1227 = sand.u32 %s190, 1
        %s1228 = scalar_lea.vmem [#allocation8], %s1227
        // Predicated region
        $region53: #{tpu_custom_call.1} parent=43 // pred_check
          %p1229 = pneg %p174
        $region54: #{tpu_custom_call.1} parent=43 // pred_check_branch
          %1231 = sbr.rel (%p1229) target = $region56
        $region55: #{tpu_custom_call.1} parent=43 // pred_region
          %s1233 = ssub.s32 16, 16
          %1234 = vsyncadd [#allocation7], %s1233
          %s1236 = sshll.u32 [#allocation6], 4
          %s1237 = int_to_ptr.vmem [resolvable:$true] %s1236
          %1239 = dma.vmem_to_hbm [thread:$0]  %s1237, 16, %s6, [#allocation7]
        $region56: #{tpu_custom_call.1} parent=43 // pred_fallthru
          _
        // Predicated region
        $region57: #{tpu_custom_call.1} parent=43 // pred_check
          %p1240 = pneg %p200
        $region58: #{tpu_custom_call.1} parent=43 // pred_check_branch
          %1242 = sbr.rel (%p1240) target = $region60
        $region59: #{tpu_custom_call.1} parent=43 // pred_region
          %s1244 = ssub.s32 16, 16
          %1245 = vsyncadd %s1226, %s1244
          %s1246 = smul.addr %s25, 16
          %s1247 = scalar_lea.hbm %s7, %s1246
          %s1249 = sshll.u32 %s1228, 4
          %s1250 = int_to_ptr.vmem [resolvable:$true] %s1249
          %1252 = dma.vmem_to_hbm [thread:$0]  %s1250, 16, %s1247, %s1226
        $region60: #{tpu_custom_call.1} parent=43 // pred_fallthru
          _
        // Predicated region
        $region61: #{tpu_custom_call.1} parent=43 // pred_check
          %p1253 = pneg %p174
        $region62: #{tpu_custom_call.1} parent=43 // pred_check_branch
          %1255 = sbr.rel (%p1253) target = $region64
        $region63: #{tpu_custom_call.1} parent=43 // pred_region
          %1256 = dma.done [#allocation7], 16
        $region64: #{tpu_custom_call.1} parent=43 // pred_fallthru
          _
      $region44: #{tpu_custom_call.1} parent=5 // pred_fallthru
        _
      %p1257 = scmp.le.s32.totalorder 2, %s20
      // Predicated region
      $region65: #{tpu_custom_call.1} parent=5 // pred_check
        %p1258 = pneg %p1257
      $region66: #{tpu_custom_call.1} parent=5 // pred_check_branch
        %1260 = sbr.rel (%p1258) target = $region68
      $region67: #{tpu_custom_call.1} parent=5 // pred_region
        %s1261 = ssub.s32 %s20, 2
        // Predicated region
        $region69: #{tpu_custom_call.1} parent=67 // pred_check
          %p1262 = pneg %p206
        $region70: #{tpu_custom_call.1} parent=67 // pred_check_branch
          %1264 = sbr.rel (%p1262) target = $region72
        $region71: #{tpu_custom_call.1} parent=67 // pred_region
          %s1265 = sand.u32 %s191, 1
          %s1266 = scalar_lea.sflag [#allocation9], %s1265
          %s1267 = sand.u32 %s191, 1
          %s1268 = scalar_lea.vmem [#allocation8], %s1267
          %1269 = dma.done %s1266, 16
        $region72: #{tpu_custom_call.1} parent=67 // pred_fallthru
          _
      $region68: #{tpu_custom_call.1} parent=5 // pred_fallthru
        _
    $region6: #{tpu_custom_call.1} parent=1 // loop_footer
      %s24 = sadd.s32 1, %s20
    $region7: #{tpu_custom_call.1} parent=1 // loop_footer_branch
      %19 = sbr.rel target = $region3
    $region8: #{tpu_custom_call.1} parent=1 // loop_exit
      _
    %1270 = vsyncpa [#allocation7], 1
    %s1271 = scalar_lea.sflag [#allocation7], 1
    %1272 = vsyncpa %s1271, 1
    %1273 = vsyncpa [#allocation9], 1
    %s1274 = scalar_lea.sflag [#allocation9], 1
    %1275 = vsyncpa %s1274, 1

</llo_original>
